<compile_context>
chip_gen: v6e
topology: v6e:2x2x1
jax: 0.10.0
libtpu: 0.0.40
codegen_flags: <defaults>
</compile_context>

<pallas_src>
import functools

import jax
import jax.numpy as jnp
from jax.experimental import pallas as pl
from jax.experimental.pallas import tpu as pltpu

BN_EPS = 1e-5
LANE = 128


def _round_up(x, m):
    return ((x + m - 1) // m) * m


def _vmem_cap():
    """Generation-aware VMEM budget: ~75% of physical (v7x ~48 MiB, v5e/v6e ~96 MiB)."""
    try:
        phys = pltpu.get_tpu_info().vmem_capacity_bytes
    except Exception:
        phys = 64 << 20  # conservative default (v7x-sized)
    return int(phys * 3 // 4)


def _vmem_limit(block_bytes, scratch_bytes=0, temp_bytes=0):
    # Double-buffered pipeline blocks + resident scratch + in-kernel temporaries + margin.
    need = 2 * sum(block_bytes) + scratch_bytes + temp_bytes + (4 << 20)
    return int(min(max(need, 8 << 20), _vmem_cap()))


def _choose_tiles(n_nodes, f_in_pad_max):
    """Pick (tm, tk, n_pad): tm, tk are 128*2^j, tm | tk | n_pad."""
    n0 = _round_up(n_nodes, LANE)
    # Row tile: large (amortize ~0.35us/step overhead), bounded by the f32 accumulator.
    tm = 512
    while tm > LANE and tm * f_in_pad_max * 4 > (4 << 20):
        tm //= 2
    # Reduction tile: ~1-2 MB of int8 A per step, bounded by the streamed Z tile.
    tk = 2048
    while tk > LANE and tk * f_in_pad_max * 2 > (8 << 20):
        tk //= 2
    # Shrink both for small graphs so padding stays bounded.
    while tm > n0:
        tm //= 2
    while tk > n0:
        tk //= 2
    tm = max(tm, LANE)
    tk = max(tk, tm)
    n_pad = _round_up(n0, tk)
    return tm, tk, n_pad


# ---------------------------------------------------------------------------
# Fused per-layer Pallas kernel
# ---------------------------------------------------------------------------
def gcn_layer_kernel(a_ref, x_ref, w_ref, di_ref, b_ref, o_ref, acc_ref,
                     *, tk, x_resident, final, valid_cols):
    """One fused GCN layer.  grid = (row tile i, reduction tile k)."""
    k = pl.program_id(1)

    if x_resident:
        # Whole activation matrix is resident in VMEM; slice the k-th row block.
        z = x_ref[pl.ds(pl.multiple_of(k * tk, LANE), tk), :]
    else:
        z = x_ref[...]

    # int8 binary A tile -> bf16 on the VPU (hidden under the A DMA), MXU aggregate.
    part = jnp.dot(a_ref[...].astype(jnp.bfloat16), z,
                   preferred_element_type=jnp.float32)

    @pl.when(k == 0)
    def _():
        acc_ref[...] = part          # direct init: no zero-store + read-modify-write

    @pl.when(k > 0)
    def _():
        acc_ref[...] += part

    @pl.when(k == pl.num_programs(1) - 1)
    def _():
        di = di_ref[...]                                        # (tm, 1) f32
        h = jnp.dot(acc_ref[...].astype(jnp.bfloat16), w_ref[...],
                    preferred_element_type=jnp.float32)
        h = h * di + b_ref[...]                                 # = A_hat X W' + b'
        if final:
            lane = jax.lax.broadcasted_iota(jnp.int32, h.shape, 1)
            mask = lane < valid_cols
            hm = jnp.where(mask, h, jnp.float32(-1e30))
            m = jnp.max(hm, axis=-1, keepdims=True)
            s = h - m
            e = jnp.where(mask, jnp.exp(s), 0.0)
            lse = jnp.log(jnp.sum(e, axis=-1, keepdims=True))
            # Zero-fill padded lanes so the padded buffer never carries -inf/NaN.
            o_ref[...] = jnp.where(mask, s - lse, 0.0).astype(o_ref.dtype)
        else:
            # Store the pre-scaled activation Z = D^{-1/2} relu(h) for the next layer.
            o_ref[...] = (di * jnp.maximum(h, 0.0)).astype(o_ref.dtype)


def gcn_layer(a_i8, z, w, dinv_col, b, *, tm, tk, final, valid_cols, force_stream_x):
    n_pad = a_i8.shape[0]
    f_in_pad = z.shape[1]
    f_out_pad = w.shape[1]
    grid = (n_pad // tm, n_pad // tk)
    out_dtype = jnp.float32 if final else jnp.bfloat16
    out_itemsize = jnp.dtype(out_dtype).itemsize

    # Per-block VMEM bytes (each pipelined buffer is double-buffered).
    a_blk = tm * tk                                # int8
    w_blk = f_in_pad * f_out_pad * 2
    di_blk = tm * LANE * 4                         # (tm,1) f32, lane-padded layout
    b_blk = 8 * f_out_pad * 4
    o_blk = tm * f_out_pad * out_itemsize
    acc_bytes = tm * f_in_pad * 4
    tmp_bytes = 2 * a_blk + tk * f_in_pad * 2      # bf16 cast of A tile + Z slice copy
    z_full = n_pad * f_in_pad * 2
    z_tile = tk * f_in_pad * 2

    resident_need = (2 * (a_blk + z_full + w_blk + di_blk + b_blk + o_blk)
                     + acc_bytes + tmp_bytes + (4 << 20))
    x_resident = (not force_stream_x) and (resident_need <= _vmem_cap())

    if x_resident:
        x_spec = pl.BlockSpec((n_pad, f_in_pad), lambda i, k: (0, 0))   # resident
        z_blk, z_reads = z_full, 1
    else:
        x_spec = pl.BlockSpec((tk, f_in_pad), lambda i, k: (k, 0))      # streamed
        z_blk, z_reads = z_tile, grid[0]

    cost = pl.CostEstimate(
        flops=2 * n_pad * n_pad * f_in_pad + 2 * n_pad * f_in_pad * f_out_pad,
        transcendentals=(n_pad * f_out_pad) if final else 0,
        bytes_accessed=(n_pad * n_pad                        # A (int8, read once)
                        + z_reads * n_pad * f_in_pad * 2     # activations
                        + f_in_pad * f_out_pad * 2           # W (resident)
                        + n_pad * 4 + f_out_pad * 4          # d^{-1/2}, bias
                        + n_pad * f_out_pad * out_itemsize))

    kern = functools.partial(gcn_layer_kernel, tk=tk, x_resident=x_resident,
                             final=final, valid_cols=valid_cols)
    return pl.pallas_call(
        kern,
        out_shape=jax.ShapeDtypeStruct((n_pad, f_out_pad), out_dtype),
        grid=grid,
        in_specs=[
            pl.BlockSpec((tm, tk), lambda i, k: (i, k)),               # A_bin (int8)
            x_spec,                                                    # Z activations
            pl.BlockSpec((f_in_pad, f_out_pad), lambda i, k: (0, 0)),  # W (resident)
            pl.BlockSpec((tm, 1), lambda i, k: (i, 0)),                # d_i^{-1/2}
            pl.BlockSpec((1, f_out_pad), lambda i, k: (0, 0)),         # bias
        ],
        out_specs=pl.BlockSpec((tm, f_out_pad), lambda i, k: (i, 0)),
        scratch_shapes=[pltpu.VMEM((tm, f_in_pad), jnp.float32)],
        compiler_params=pltpu.CompilerParams(
            # TODO(synk): on v7x, CORE_PARALLEL / core_map on the row axis would shard
            # across both TensorCores; kept portable ("parallel") here.
            dimension_semantics=("parallel", "arbitrary"),
            vmem_limit_bytes=_vmem_limit(
                [a_blk, z_blk, w_blk, di_blk, b_blk, o_blk], acc_bytes, tmp_bytes)),
        cost_estimate=cost,
    )(a_i8, z, w, dinv_col, b)


# ---------------------------------------------------------------------------
# Model glue (plain JAX: data prep, BN folding, padding)
# ---------------------------------------------------------------------------
def _fold_bn(w, b, gamma, beta, mean, var):
    """Fold eval-mode BatchNorm1d into the conv weight/bias (per output column)."""
    scale = gamma * jax.lax.rsqrt(var + BN_EPS)
    return w * scale[None, :], (b - mean) * scale + beta


def _pad2(a, rows, cols):
    return jnp.pad(a, ((0, rows - a.shape[0]), (0, cols - a.shape[1])))


@functools.partial(jax.jit, static_argnames=("force_stream_x",))
def gcn_forward(x, adj, convs_w, convs_b, bn_gamma, bn_beta, bn_mean, bn_var,
                force_stream_x=False):
    n = x.shape[0]
    out_dim = convs_w[-1].shape[1]
    num_layers = len(convs_w)

    f_in_pads = [_round_up(x.shape[1], LANE)] + [
        _round_up(w.shape[1], LANE) for w in convs_w[:-1]]
    tm, tk, n_pad = _choose_tiles(n, max(f_in_pads))

    # Binary (A + I) as an int8 mask; degrees / D^{-1/2} kept in f32.
    a_bin = ((adj > 0.5) | jnp.eye(n, dtype=bool)).astype(jnp.float32)
    deg = jnp.sum(a_bin, axis=1)
    dinv = jnp.where(deg > 0, jax.lax.rsqrt(deg), 0.0)

    a_i8 = _pad2(a_bin, n_pad, n_pad).astype(jnp.int8)
    dinv_col = jnp.pad(dinv, (0, n_pad - n)).reshape(n_pad, 1).astype(jnp.float32)

    # Activations are carried pre-scaled: Z_l = D^{-1/2} H_l, with Z_0 = D^{-1/2} X,
    # so the kernels only need the row-tile slice of D^{-1/2} in their epilogues.
    z = _pad2(dinv[:, None] * x, n_pad, f_in_pads[0]).astype(jnp.bfloat16)

    for layer in range(num_layers):
        final = layer == num_layers - 1
        w, b = convs_w[layer], convs_b[layer]
        if not final:
            w, b = _fold_bn(w, b, bn_gamma[layer], bn_beta[layer],
                            bn_mean[layer], bn_var[layer])
        f_in_pad = z.shape[1]
        f_out = w.shape[1]
        f_out_pad = _round_up(f_out, LANE)
        w_pad = _pad2(w, f_in_pad, f_out_pad).astype(jnp.bfloat16)
        b_pad = jnp.pad(b, (0, f_out_pad - f_out)).reshape(1, f_out_pad).astype(jnp.float32)

        z = gcn_layer(a_i8, z, w_pad, dinv_col, b_pad, tm=tm, tk=tk,
                      final=final, valid_cols=f_out, force_stream_x=force_stream_x)

    return z[:n, :out_dim]


def gcn_reference(x, adj, convs_w, convs_b, bn_gamma, bn_beta, bn_mean, bn_var):
    """Plain-JAX f32 reference (GCNConv + eval BatchNorm1d + relu + log_softmax)."""
    n = x.shape[0]
    a_bin = ((adj > 0.5) | jnp.eye(n, dtype=bool)).astype(jnp.float32)
    deg = jnp.sum(a_bin, axis=1)
    dinv = jnp.where(deg > 0, 1.0 / jnp.sqrt(deg), 0.0)
    a_hat = a_bin * dinv[:, None] * dinv[None, :]
    h = x
    num_layers = len(convs_w)
    for layer in range(num_layers):
        h = a_hat @ (h @ convs_w[layer]) + convs_b[layer]
        if layer < num_layers - 1:
            h = ((h - bn_mean[layer]) * jax.lax.rsqrt(bn_var[layer] + BN_EPS)
                 * bn_gamma[layer] + bn_beta[layer])
            h = jnp.maximum(h, 0.0)
    return jax.nn.log_softmax(h, axis=-1)


def init_gcn_params(key, input_dim, hidden_dim, output_dim, num_layers):
    dims = [input_dim] + [hidden_dim] * (num_layers - 1) + [output_dim]
    params = {"convs": [], "bns": []}
    keys = jax.random.split(key, num_layers * 2 + (num_layers - 1) * 2)
    k = 0
    for layer in range(num_layers):
        fan_in, fan_out = dims[layer], dims[layer + 1]
        scale = 1.0 / jnp.sqrt(jnp.float32(fan_in))
        w = jax.random.uniform(keys[k], (fan_in, fan_out), jnp.float32, -scale, scale); k += 1
        b = jax.random.uniform(keys[k], (fan_out,), jnp.float32, -scale, scale); k += 1
        params["convs"].append({"w": w, "b": b})
    for layer in range(num_layers - 1):
        f = dims[layer + 1]
        gamma = jnp.ones((f,), jnp.float32)
        beta = jnp.zeros((f,), jnp.float32)
        mean = 0.1 * jax.random.normal(keys[k], (f,), jnp.float32); k += 1
        var = 1.0 + 0.1 * jax.random.uniform(keys[k], (f,), jnp.float32); k += 1
        params["bns"].append({"gamma": gamma, "beta": beta, "mean": mean, "var": var})
    return params


# ---------------------------------------------------------------------------
if __name__ == "__main__":
    N_NODES = 16
    INPUT_DIM = 8
    HIDDEN_DIM = 32
    OUTPUT_DIM = 8
    NUM_LAYERS = 3

    key = jax.random.PRNGKey(0)
    k_x, k_adj, k_params = jax.random.split(key, 3)

    x = jax.random.normal(k_x, (N_NODES, INPUT_DIM), jnp.float32)
    # Random symmetric 0/1 adjacency (no self loops; added during normalization).
    raw = jax.random.bernoulli(k_adj, 0.3, (N_NODES, N_NODES)).astype(jnp.float32)
    adj = jnp.clip(raw + raw.T, 0.0, 1.0) * (1.0 - jnp.eye(N_NODES, dtype=jnp.float32))

    params = init_gcn_params(k_params, INPUT_DIM, HIDDEN_DIM, OUTPUT_DIM, NUM_LAYERS)
    convs_w = tuple(p["w"] for p in params["convs"])
    convs_b = tuple(p["b"] for p in params["convs"])
    bn_gamma = tuple(p["gamma"] for p in params["bns"])
    bn_beta = tuple(p["beta"] for p in params["bns"])
    bn_mean = tuple(p["mean"] for p in params["bns"])
    bn_var = tuple(p["var"] for p in params["bns"])

    args = (x, adj, convs_w, convs_b, bn_gamma, bn_beta, bn_mean, bn_var)

    out = jax.block_until_ready(gcn_forward(*args))                           # resident-Z path
    out_stream = jax.block_until_ready(gcn_forward(*args, force_stream_x=True))  # streamed path
    ref = jax.block_until_ready(gcn_reference(*args))

    assert out.shape == (N_NODES, OUTPUT_DIM)
    assert bool(jnp.all(jnp.isfinite(out)))
    row_sums = jnp.sum(jnp.exp(out), axis=-1)
    assert bool(jnp.all(jnp.abs(row_sums - 1.0) < 1e-3))
    # bf16 activations / int8 binary A with f32 accumulation -> ~1e-2 abs error vs f32 ref.
    assert bool(jnp.allclose(out, ref, atol=1e-1, rtol=1e-1))
    assert bool(jnp.allclose(out, out_stream, atol=1e-3, rtol=1e-3))

    print("KERNEL_OK")
</pallas_src>

<mosaic_0001>
module attributes {stable_mosaic.version = 11 : i64} {
  func.func @gcn_layer_kernel(%arg0: i32, %arg1: i32, %arg2: memref<128x128xi8, #tpu.memory_space<vmem>>, %arg3: memref<128x128xbf16, #tpu.memory_space<vmem>>, %arg4: memref<128x128xbf16, #tpu.memory_space<vmem>>, %arg5: memref<128x1xf32, #tpu.memory_space<vmem>>, %arg6: memref<1x128xf32, #tpu.memory_space<vmem>>, %arg7: memref<128x128xbf16, #tpu.memory_space<vmem>>, %arg8: memref<128x128xf32, #tpu.memory_space<vmem>>) attributes {dimension_semantics = [#tpu.dimension_semantics<parallel>, #tpu.dimension_semantics<arbitrary>], iteration_bounds = array<i64: 1, 1>, scalar_prefetch = 0 : i64, scratch_operands = 1 : i64, tpu.core_type = #tpu.core_type<tc>, window_params = [{transform_indices = @transform_0, window_bounds = array<i64: 128, 128>}, {pipeline_mode = #tpu.pipeline_mode<synchronous>, transform_indices = @transform_1, window_bounds = array<i64: 128, 128>}, {pipeline_mode = #tpu.pipeline_mode<synchronous>, transform_indices = @transform_2, window_bounds = array<i64: 128, 128>}, {transform_indices = @transform_3, window_bounds = array<i64: 128, 1>}, {pipeline_mode = #tpu.pipeline_mode<synchronous>, transform_indices = @transform_4, window_bounds = array<i64: 1, 128>}, {transform_indices = @transform_5, window_bounds = array<i64: 128, 128>}]} {
    %c128_i32 = arith.constant 128 : i32
    %0 = arith.muli %arg1, %c128_i32 : i32
    %1 = tpu.assume_multiple %0, 128 : i32
    %2 = arith.index_cast %1 : i32 to index
    %c0 = arith.constant 0 : index
    %3 = vector.load %arg3[%2, %c0] : memref<128x128xbf16, #tpu.memory_space<vmem>>, vector<128x128xbf16>
    %c0_0 = arith.constant 0 : index
    %c0_1 = arith.constant 0 : index
    %4 = vector.load %arg2[%c0_0, %c0_1] : memref<128x128xi8, #tpu.memory_space<vmem>>, vector<128x128xi8>
    %5 = arith.sitofp %4 : vector<128x128xi8> to vector<128x128xbf16>
    %cst = arith.constant dense<0.000000e+00> : vector<128x128xf32>
    %6 = tpu.matmul %5, %3, %cst {dimension_numbers = #tpu.dot_dimension_numbers<[1], [0], [0], [1], [0, 0, 1, 1], [], []>} : vector<128x128xbf16>, vector<128x128xbf16>, vector<128x128xf32> -> vector<128x128xf32>
    %c0_i32 = arith.constant 0 : i32
    %7 = arith.cmpi eq, %arg1, %c0_i32 : i32
    %8 = arith.extui %7 : i1 to i32
    %c0_i32_2 = arith.constant 0 : i32
    %9 = arith.cmpi ne, %8, %c0_i32_2 : i32
    scf.if %9 {
      %c0_7 = arith.constant 0 : index
      %c0_8 = arith.constant 0 : index
      %16 = vector.load %arg8[%c0_7, %c0_8] : memref<128x128xf32, #tpu.memory_space<vmem>>, vector<128x128xf32>
      tpu.vector_store %arg8[%c0_7, %c0_8], %6 {strides = array<i32>} : memref<128x128xf32, #tpu.memory_space<vmem>>, vector<128x128xf32>,
    } else {
    }
    %c0_i32_3 = arith.constant 0 : i32
    %10 = arith.cmpi sgt, %arg1, %c0_i32_3 : i32
    %11 = arith.extui %10 : i1 to i32
    %c0_i32_4 = arith.constant 0 : i32
    %12 = arith.cmpi ne, %11, %c0_i32_4 : i32
    scf.if %12 {
      %c0_7 = arith.constant 0 : index
      %c0_8 = arith.constant 0 : index
      %16 = vector.load %arg8[%c0_7, %c0_8] : memref<128x128xf32, #tpu.memory_space<vmem>>, vector<128x128xf32>
      %17 = arith.addf %16, %6 : vector<128x128xf32>
      %c0_9 = arith.constant 0 : index
      %c0_10 = arith.constant 0 : index
      %18 = vector.load %arg8[%c0_9, %c0_10] : memref<128x128xf32, #tpu.memory_space<vmem>>, vector<128x128xf32>
      tpu.vector_store %arg8[%c0_9, %c0_10], %17 {strides = array<i32>} : memref<128x128xf32, #tpu.memory_space<vmem>>, vector<128x128xf32>,
    } else {
    }
    %c0_i32_5 = arith.constant 0 : i32
    %13 = arith.cmpi eq, %arg1, %c0_i32_5 : i32
    %14 = arith.extui %13 : i1 to i32
    %c0_i32_6 = arith.constant 0 : i32
    %15 = arith.cmpi ne, %14, %c0_i32_6 : i32
    scf.if %15 {
      %c0_7 = arith.constant 0 : index
      %c0_8 = arith.constant 0 : index
      %16 = vector.load %arg5[%c0_7, %c0_8] : memref<128x1xf32, #tpu.memory_space<vmem>>, vector<128x1xf32>
      %c0_9 = arith.constant 0 : index
      %c0_10 = arith.constant 0 : index
      %17 = vector.load %arg8[%c0_9, %c0_10] : memref<128x128xf32, #tpu.memory_space<vmem>>, vector<128x128xf32>
      %18 = arith.truncf %17 : vector<128x128xf32> to vector<128x128xbf16>
      %c0_11 = arith.constant 0 : index
      %c0_12 = arith.constant 0 : index
      %19 = vector.load %arg4[%c0_11, %c0_12] : memref<128x128xbf16, #tpu.memory_space<vmem>>, vector<128x128xbf16>
      %cst_13 = arith.constant dense<0.000000e+00> : vector<128x128xf32>
      %20 = tpu.matmul %18, %19, %cst_13 {dimension_numbers = #tpu.dot_dimension_numbers<[1], [0], [0], [1], [0, 0, 1, 1], [], []>} : vector<128x128xbf16>, vector<128x128xbf16>, vector<128x128xf32> -> vector<128x128xf32>
      %21 = vector.broadcast %16 : vector<128x1xf32> to vector<128x128xf32>
      %22 = arith.mulf %20, %21 : vector<128x128xf32>
      %c0_14 = arith.constant 0 : index
      %c0_15 = arith.constant 0 : index
      %23 = vector.load %arg6[%c0_14, %c0_15] : memref<1x128xf32, #tpu.memory_space<vmem>>, vector<1x128xf32>
      %24 = vector.broadcast %23 : vector<1x128xf32> to vector<128x128xf32>
      %25 = arith.addf %22, %24 : vector<128x128xf32>
      %cst_16 = arith.constant 0.000000e+00 : f32
      %26 = vector.broadcast %cst_16 : f32 to vector<128x128xf32>
      %27 = arith.maximumf %25, %26 : vector<128x128xf32>
      %28 = vector.broadcast %16 : vector<128x1xf32> to vector<128x128xf32>
      %29 = arith.mulf %28, %27 : vector<128x128xf32>
      %30 = arith.truncf %29 : vector<128x128xf32> to vector<128x128xbf16>
      %c0_17 = arith.constant 0 : index
      %c0_18 = arith.constant 0 : index
      %31 = vector.load %arg7[%c0_17, %c0_18] : memref<128x128xbf16, #tpu.memory_space<vmem>>, vector<128x128xbf16>
      tpu.vector_store %arg7[%c0_17, %c0_18], %30 {strides = array<i32>} : memref<128x128xbf16, #tpu.memory_space<vmem>>, vector<128x128xbf16>,
    } else {
    }
    return
  }
  func.func @transform_0(%arg0: i32, %arg1: i32) -> (i32, i32) {
    %c0_i32 = arith.constant 0 : i32
    return %arg0, %arg1 : i32, i32
  }
  func.func @transform_1(%arg0: i32, %arg1: i32) -> (i32, i32) {
    %c0_i32 = arith.constant 0 : i32
    %c0_i32_0 = arith.constant 0 : i32
    %c0_i32_1 = arith.constant 0 : i32
    return %c0_i32, %c0_i32_0 : i32, i32
  }
  func.func @transform_2(%arg0: i32, %arg1: i32) -> (i32, i32) {
    %c0_i32 = arith.constant 0 : i32
    %c0_i32_0 = arith.constant 0 : i32
    %c0_i32_1 = arith.constant 0 : i32
    return %c0_i32, %c0_i32_0 : i32, i32
  }
  func.func @transform_3(%arg0: i32, %arg1: i32) -> (i32, i32) {
    %c0_i32 = arith.constant 0 : i32
    %c0_i32_0 = arith.constant 0 : i32
    return %arg0, %c0_i32 : i32, i32
  }
  func.func @transform_4(%arg0: i32, %arg1: i32) -> (i32, i32) {
    %c0_i32 = arith.constant 0 : i32
    %c0_i32_0 = arith.constant 0 : i32
    %c0_i32_1 = arith.constant 0 : i32
    return %c0_i32, %c0_i32_0 : i32, i32
  }
  func.func @transform_5(%arg0: i32, %arg1: i32) -> (i32, i32) {
    %c0_i32 = arith.constant 0 : i32
    %c0_i32_0 = arith.constant 0 : i32
    return %arg0, %c0_i32 : i32, i32
  }
}

module attributes {stable_mosaic.version = 11 : i64} {
  func.func @gcn_layer_kernel(%arg0: i32, %arg1: i32, %arg2: memref<128x128xi8, #tpu.memory_space<vmem>>, %arg3: memref<128x128xbf16, #tpu.memory_space<vmem>>, %arg4: memref<128x128xbf16, #tpu.memory_space<vmem>>, %arg5: memref<128x1xf32, #tpu.memory_space<vmem>>, %arg6: memref<1x128xf32, #tpu.memory_space<vmem>>, %arg7: memref<128x128xf32, #tpu.memory_space<vmem>>, %arg8: memref<128x128xf32, #tpu.memory_space<vmem>>) attributes {dimension_semantics = [#tpu.dimension_semantics<parallel>, #tpu.dimension_semantics<arbitrary>], iteration_bounds = array<i64: 1, 1>, scalar_prefetch = 0 : i64, scratch_operands = 1 : i64, tpu.core_type = #tpu.core_type<tc>, window_params = [{transform_indices = @transform_0, window_bounds = array<i64: 128, 128>}, {pipeline_mode = #tpu.pipeline_mode<synchronous>, transform_indices = @transform_1, window_bounds = array<i64: 128, 128>}, {pipeline_mode = #tpu.pipeline_mode<synchronous>, transform_indices = @transform_2, window_bounds = array<i64: 128, 128>}, {transform_indices = @transform_3, window_bounds = array<i64: 128, 1>}, {pipeline_mode = #tpu.pipeline_mode<synchronous>, transform_indices = @transform_4, window_bounds = array<i64: 1, 128>}, {transform_indices = @transform_5, window_bounds = array<i64: 128, 128>}]} {
    %c128_i32 = arith.constant 128 : i32
    %0 = arith.muli %arg1, %c128_i32 : i32
    %1 = tpu.assume_multiple %0, 128 : i32
    %2 = arith.index_cast %1 : i32 to index
    %c0 = arith.constant 0 : index
    %3 = vector.load %arg3[%2, %c0] : memref<128x128xbf16, #tpu.memory_space<vmem>>, vector<128x128xbf16>
    %c0_0 = arith.constant 0 : index
    %c0_1 = arith.constant 0 : index
    %4 = vector.load %arg2[%c0_0, %c0_1] : memref<128x128xi8, #tpu.memory_space<vmem>>, vector<128x128xi8>
    %5 = arith.sitofp %4 : vector<128x128xi8> to vector<128x128xbf16>
    %cst = arith.constant dense<0.000000e+00> : vector<128x128xf32>
    %6 = tpu.matmul %5, %3, %cst {dimension_numbers = #tpu.dot_dimension_numbers<[1], [0], [0], [1], [0, 0, 1, 1], [], []>} : vector<128x128xbf16>, vector<128x128xbf16>, vector<128x128xf32> -> vector<128x128xf32>
    %c0_i32 = arith.constant 0 : i32
    %7 = arith.cmpi eq, %arg1, %c0_i32 : i32
    %8 = arith.extui %7 : i1 to i32
    %c0_i32_2 = arith.constant 0 : i32
    %9 = arith.cmpi ne, %8, %c0_i32_2 : i32
    scf.if %9 {
      %c0_7 = arith.constant 0 : index
      %c0_8 = arith.constant 0 : index
      %16 = vector.load %arg8[%c0_7, %c0_8] : memref<128x128xf32, #tpu.memory_space<vmem>>, vector<128x128xf32>
      tpu.vector_store %arg8[%c0_7, %c0_8], %6 {strides = array<i32>} : memref<128x128xf32, #tpu.memory_space<vmem>>, vector<128x128xf32>,
    } else {
    }
    %c0_i32_3 = arith.constant 0 : i32
    %10 = arith.cmpi sgt, %arg1, %c0_i32_3 : i32
    %11 = arith.extui %10 : i1 to i32
    %c0_i32_4 = arith.constant 0 : i32
    %12 = arith.cmpi ne, %11, %c0_i32_4 : i32
    scf.if %12 {
      %c0_7 = arith.constant 0 : index
      %c0_8 = arith.constant 0 : index
      %16 = vector.load %arg8[%c0_7, %c0_8] : memref<128x128xf32, #tpu.memory_space<vmem>>, vector<128x128xf32>
      %17 = arith.addf %16, %6 : vector<128x128xf32>
      %c0_9 = arith.constant 0 : index
      %c0_10 = arith.constant 0 : index
      %18 = vector.load %arg8[%c0_9, %c0_10] : memref<128x128xf32, #tpu.memory_space<vmem>>, vector<128x128xf32>
      tpu.vector_store %arg8[%c0_9, %c0_10], %17 {strides = array<i32>} : memref<128x128xf32, #tpu.memory_space<vmem>>, vector<128x128xf32>,
    } else {
    }
    %c0_i32_5 = arith.constant 0 : i32
    %13 = arith.cmpi eq, %arg1, %c0_i32_5 : i32
    %14 = arith.extui %13 : i1 to i32
    %c0_i32_6 = arith.constant 0 : i32
    %15 = arith.cmpi ne, %14, %c0_i32_6 : i32
    scf.if %15 {
      %c0_7 = arith.constant 0 : index
      %c0_8 = arith.constant 0 : index
      %16 = vector.load %arg5[%c0_7, %c0_8] : memref<128x1xf32, #tpu.memory_space<vmem>>, vector<128x1xf32>
      %c0_9 = arith.constant 0 : index
      %c0_10 = arith.constant 0 : index
      %17 = vector.load %arg8[%c0_9, %c0_10] : memref<128x128xf32, #tpu.memory_space<vmem>>, vector<128x128xf32>
      %18 = arith.truncf %17 : vector<128x128xf32> to vector<128x128xbf16>
      %c0_11 = arith.constant 0 : index
      %c0_12 = arith.constant 0 : index
      %19 = vector.load %arg4[%c0_11, %c0_12] : memref<128x128xbf16, #tpu.memory_space<vmem>>, vector<128x128xbf16>
      %cst_13 = arith.constant dense<0.000000e+00> : vector<128x128xf32>
      %20 = tpu.matmul %18, %19, %cst_13 {dimension_numbers = #tpu.dot_dimension_numbers<[1], [0], [0], [1], [0, 0, 1, 1], [], []>} : vector<128x128xbf16>, vector<128x128xbf16>, vector<128x128xf32> -> vector<128x128xf32>
      %21 = vector.broadcast %16 : vector<128x1xf32> to vector<128x128xf32>
      %22 = arith.mulf %20, %21 : vector<128x128xf32>
      %c0_14 = arith.constant 0 : index
      %c0_15 = arith.constant 0 : index
      %23 = vector.load %arg6[%c0_14, %c0_15] : memref<1x128xf32, #tpu.memory_space<vmem>>, vector<1x128xf32>
      %24 = vector.broadcast %23 : vector<1x128xf32> to vector<128x128xf32>
      %25 = arith.addf %22, %24 : vector<128x128xf32>
      %26 = tpu.iota {dimensions = array<i32: 1>} : vector<128x128xi32>
      %c8_i32 = arith.constant 8 : i32
      %27 = vector.broadcast %c8_i32 : i32 to vector<128x128xi32>
      %28 = arith.cmpi slt, %26, %27 : vector<128x128xi32>
      %cst_16 = arith.constant -1.000000e+30 : f32
      %29 = vector.broadcast %cst_16 : f32 to vector<128x128xf32>
      %30 = arith.select %28, %25, %29 : vector<128x128xi1>, vector<128x128xf32>
      %cst_17 = arith.constant dense<0xFF800000> : vector<128xf32>
      %31 = vector.multi_reduction <maximumf>, %30, %cst_17 [1] : vector<128x128xf32> to vector<128xf32>
      %32 = vector.shape_cast %31 : vector<128xf32> to vector<128x1xf32>
      %33 = vector.broadcast %32 : vector<128x1xf32> to vector<128x128xf32>
      %34 = arith.subf %25, %33 : vector<128x128xf32>
      %35 = math.exp %34 : vector<128x128xf32>
      %cst_18 = arith.constant 0.000000e+00 : f32
      %36 = vector.broadcast %cst_18 : f32 to vector<128x128xf32>
      %37 = arith.select %28, %35, %36 : vector<128x128xi1>, vector<128x128xf32>
      %cst_19 = arith.constant dense<0.000000e+00> : vector<128xf32>
      %38 = vector.multi_reduction <add>, %37, %cst_19 [1] : vector<128x128xf32> to vector<128xf32>
      %39 = vector.shape_cast %38 : vector<128xf32> to vector<128x1xf32>
      %40 = math.log %39 : vector<128x1xf32>
      %41 = vector.broadcast %40 : vector<128x1xf32> to vector<128x128xf32>
      %42 = arith.subf %34, %41 : vector<128x128xf32>
      %cst_20 = arith.constant 0.000000e+00 : f32
      %43 = vector.broadcast %cst_20 : f32 to vector<128x128xf32>
      %44 = arith.select %28, %42, %43 : vector<128x128xi1>, vector<128x128xf32>
      %c0_21 = arith.constant 0 : index
      %c0_22 = arith.constant 0 : index
      %45 = vector.load %arg7[%c0_21, %c0_22] : memref<128x128xf32, #tpu.memory_space<vmem>>, vector<128x128xf32>
      tpu.vector_store %arg7[%c0_21, %c0_22], %44 {strides = array<i32>} : memref<128x128xf32, #tpu.memory_space<vmem>>, vector<128x128xf32>,
    } else {
    }
    return
  }
  func.func @transform_0(%arg0: i32, %arg1: i32) -> (i32, i32) {
    %c0_i32 = arith.constant 0 : i32
    return %arg0, %arg1 : i32, i32
  }
  func.func @transform_1(%arg0: i32, %arg1: i32) -> (i32, i32) {
    %c0_i32 = arith.constant 0 : i32
    %c0_i32_0 = arith.constant 0 : i32
    %c0_i32_1 = arith.constant 0 : i32
    return %c0_i32, %c0_i32_0 : i32, i32
  }
  func.func @transform_2(%arg0: i32, %arg1: i32) -> (i32, i32) {
    %c0_i32 = arith.constant 0 : i32
    %c0_i32_0 = arith.constant 0 : i32
    %c0_i32_1 = arith.constant 0 : i32
    return %c0_i32, %c0_i32_0 : i32, i32
  }
  func.func @transform_3(%arg0: i32, %arg1: i32) -> (i32, i32) {
    %c0_i32 = arith.constant 0 : i32
    %c0_i32_0 = arith.constant 0 : i32
    return %arg0, %c0_i32 : i32, i32
  }
  func.func @transform_4(%arg0: i32, %arg1: i32) -> (i32, i32) {
    %c0_i32 = arith.constant 0 : i32
    %c0_i32_0 = arith.constant 0 : i32
    %c0_i32_1 = arith.constant 0 : i32
    return %c0_i32, %c0_i32_0 : i32, i32
  }
  func.func @transform_5(%arg0: i32, %arg1: i32) -> (i32, i32) {
    %c0_i32 = arith.constant 0 : i32
    %c0_i32_0 = arith.constant 0 : i32
    return %arg0, %c0_i32 : i32, i32
  }
}

</mosaic_0001>

<llo_original>
// kernel: gcn_forward.3
$region0: #{gcn_forward.3}
  #allocation0 [shape = 'u32[]', space=smem, size = 0x4, offset = 0x4, fixed_abs, tag = 'smem constant byte address 0x4 - core index']
  #allocation1 [shape = 'u32[144,128]{1,0:T(1,128)}', space=vmem, size = 0x12000, scoped, tag = 'internal scratch']
  #allocation2 [shape = 'f32[128,128]{1,0:T(8,128)}', space=vmem, size = 0x10000, scoped, tag = 'scratch operand']
  %s0 = inlined_call_operand.vmem [shape: s8[128,128], index: 0, kind: input, shape index: {}]
  %s1 = inlined_call_operand.vmem [shape: bf16[128,128], index: 1, kind: input, shape index: {}]
  %s2 = inlined_call_operand.vmem [shape: bf16[128,128], index: 2, kind: input, shape index: {}]
  %s3 = inlined_call_operand.vmem [shape: f32[128,1], index: 3, kind: input, shape index: {}]
  %s4 = inlined_call_operand.vmem [shape: f32[1,128], index: 4, kind: input, shape index: {}]
  %s5 = inlined_call_operand.vmem [shape: bf16[128,128], index: 5, kind: output, shape index: {}]
  %s6 = sld [smem:[#allocation0]]
  $region42: #{gcn_forward.3} parent=0
    _
  %s8 = ssub.s32 1, %s6
  %s9 = scalar_select 0, %s8, %s6
  // Predicated region
  $region2: #{gcn_forward.3} parent=0 // pred_check
    _
  $region3: #{gcn_forward.3} parent=0 // pred_check_branch
    %11 = sbr.rel (0) target = $region5
  $region4: #{gcn_forward.3} parent=0 // pred_region
    _
  $region5: #{gcn_forward.3} parent=0 // pred_fallthru
    _
  // Predicated region
  $region6: #{gcn_forward.3} parent=0 // pred_check
    _
  $region7: #{gcn_forward.3} parent=0 // pred_check_branch
    %13 = sbr.rel (0) target = $region9
  $region8: #{gcn_forward.3} parent=0 // pred_region
    _
  $region9: #{gcn_forward.3} parent=0 // pred_fallthru
    _
  // Predicated region
  $region10: #{gcn_forward.3} parent=0 // pred_check
    _
  $region11: #{gcn_forward.3} parent=0 // pred_check_branch
    %15 = sbr.rel (0) target = $region13
  $region12: #{gcn_forward.3} parent=0 // pred_region
    _
  $region13: #{gcn_forward.3} parent=0 // pred_fallthru
    _
  // Predicated region
  $region14: #{gcn_forward.3} parent=0 // pred_check
    _
  $region15: #{gcn_forward.3} parent=0 // pred_check_branch
    %17 = sbr.rel (0) target = $region17
  $region16: #{gcn_forward.3} parent=0 // pred_region
    _
  $region17: #{gcn_forward.3} parent=0 // pred_fallthru
    _
  // Predicated region
  $region18: #{gcn_forward.3} parent=0 // pred_check
    _
  $region19: #{gcn_forward.3} parent=0 // pred_check_branch
    %19 = sbr.rel (0) target = $region21
  $region20: #{gcn_forward.3} parent=0 // pred_region
    _
  $region21: #{gcn_forward.3} parent=0 // pred_fallthru
    _
  %s21 = smul.u32 0, 128
  %s22 = sshra.s32 %s21, 3
  %s23 = sand.u32 %s21, 7
  %s24 = smul.addr %s22, 4
  %s25 = scalar_lea.vmem %s1, %s24
  %v26 = vld [vmem:[%s25] sm:$0xf]
  %v27 = vld [vmem:[%s25 + $0x4] sm:$0xf]
  %v28 = vld [vmem:[%s25 + $0x8] sm:$0xf]
  %v29 = vld [vmem:[%s25 + $0xc] sm:$0xf]
  %v30 = vld [vmem:[%s25 + $0x10] sm:$0xf]
  %v31 = vld [vmem:[%s25 + $0x14] sm:$0xf]
  %v32 = vld [vmem:[%s25 + $0x18] sm:$0xf]
  %v33 = vld [vmem:[%s25 + $0x1c] sm:$0xf]
  %v34 = vld [vmem:[%s25 + $0x20] sm:$0xf]
  %v35 = vld [vmem:[%s25 + $0x24] sm:$0xf]
  %v36 = vld [vmem:[%s25 + $0x28] sm:$0xf]
  %v37 = vld [vmem:[%s25 + $0x2c] sm:$0xf]
  %v38 = vld [vmem:[%s25 + $0x30] sm:$0xf]
  %v39 = vld [vmem:[%s25 + $0x34] sm:$0xf]
  %v40 = vld [vmem:[%s25 + $0x38] sm:$0xf]
  %v41 = vld [vmem:[%s25 + $0x3c] sm:$0xf]
  %v42 = vld [vmem:[%s0] sm:$0xff]
  %v43 = vld [vmem:[%s0 + $0x8] sm:$0xff]
  %v44 = vld [vmem:[%s0 + $0x10] sm:$0xff]
  %v45 = vld [vmem:[%s0 + $0x18] sm:$0xff]
  %v46 = vunpack.c.l.s8.bf16 %v42
  %v47 = vunpack.c.h.s8.bf16 %v42
  %v48 = vunpack.c.l.s8.bf16 %v43
  %v49 = vunpack.c.h.s8.bf16 %v43
  %v50 = vunpack.c.l.s8.bf16 %v44
  %v51 = vunpack.c.h.s8.bf16 %v44
  %v52 = vunpack.c.l.s8.bf16 %v45
  %v53 = vunpack.c.h.s8.bf16 %v45
  %v70 = vunpack.c.l.b16 %v26
  %v71 = vunpack.c.l.b16 %v27
  %v72 = vunpack.c.l.b16 %v28
  %v73 = vunpack.c.l.b16 %v29
  %v74 = vunpack.c.l.b16 %v30
  %v75 = vunpack.c.l.b16 %v31
  %v76 = vunpack.c.l.b16 %v32
  %v77 = vunpack.c.l.b16 %v33
  %v78 = vunpack.c.l.b16 %v34
  %v79 = vunpack.c.l.b16 %v35
  %v80 = vunpack.c.l.b16 %v36
  %v81 = vunpack.c.l.b16 %v37
  %v82 = vunpack.c.l.b16 %v38
  %v83 = vunpack.c.l.b16 %v39
  %v84 = vunpack.c.l.b16 %v40
  %v85 = vunpack.c.l.b16 %v41
  %v86 = vpack.c.b16 %v71, %v70
  %v87 = vpack.c.b16 %v73, %v72
  %v88 = vpack.c.b16 %v75, %v74
  %v89 = vpack.c.b16 %v77, %v76
  %v90 = vpack.c.b16 %v79, %v78
  %v91 = vpack.c.b16 %v81, %v80
  %v92 = vpack.c.b16 %v83, %v82
  %v93 = vpack.c.b16 %v85, %v84
  %102 = vmatprep.subr.bf16.mxu0 0
  %103 = vmatpush1.bf16.msra.mxu0 %v93
  %104 = vmatprep.subr.bf16.mxu0 0
  %105 = vmatpush1.bf16.msra.mxu0 %v92
  %106 = vmatprep.subr.bf16.mxu0 0
  %107 = vmatpush1.bf16.msra.mxu0 %v91
  %108 = vmatprep.subr.bf16.mxu0 0
  %109 = vmatpush1.bf16.msra.mxu0 %v90
  %110 = vmatprep.subr.bf16.mxu0 0
  %111 = vmatpush1.bf16.msra.mxu0 %v89
  %112 = vmatprep.subr.bf16.mxu0 0
  %113 = vmatpush1.bf16.msra.mxu0 %v88
  %114 = vmatprep.subr.bf16.mxu0 0
  %115 = vmatpush1.bf16.msra.mxu0 %v87
  %116 = vmatprep.subr.bf16.mxu0 0
  %117 = vmatpush1.bf16.msra.mxu0 %v86
  %118 = vmatprep.subr.bf16.mxu0 0
  %119 = vmatpush2.bf16.msra.mxu0 0
  %120 = vmatprep.subr.bf16.mxu0 0
  %121 = vmatpush2.bf16.msra.mxu0 0
  %122 = vmatprep.subr.bf16.mxu0 0
  %123 = vmatpush2.bf16.msra.mxu0 0
  %124 = vmatprep.subr.bf16.mxu0 0
  %125 = vmatpush2.bf16.msra.mxu0 0
  %126 = vmatprep.subr.bf16.mxu0 0
  %127 = vmatpush2.bf16.msra.mxu0 0
  %128 = vmatprep.subr.bf16.mxu0 0
  %129 = vmatpush2.bf16.msra.mxu0 0
  %130 = vmatprep.subr.bf16.mxu0 0
  %131 = vmatpush2.bf16.msra.mxu0 0
  %132 = vmatprep.subr.bf16.mxu0 0
  %133 = vmatpush2.bf16.msra.mxu0 0
  %134 = vmatprep.mubr.bf16.mxu0 0
  %135 = vmatmul.mubr.bf16.gmra.mxu0 %v46
  %v136 = vpop.f32.mrf.mxu0
  %v137 = vadd.f32 0.0, %v136
  %v138 = vpop.f32.mrf.mxu0
  %v139 = vpop.f32.mrf.mxu0
  %v140 = vadd.f32 0.0, %v139
  %v141 = vpop.f32.mrf.mxu0
  %142 = vmatprep.mubr.bf16.mxu0 0
  %143 = vmatmul.mubr.bf16.gmra.mxu0 %v47
  %v144 = vpop.f32.mrf.mxu0
  %v145 = vadd.f32 0.0, %v144
  %v146 = vpop.f32.mrf.mxu0
  %v147 = vpop.f32.mrf.mxu0
  %v148 = vadd.f32 0.0, %v147
  %v149 = vpop.f32.mrf.mxu0
  %150 = vmatprep.mubr.bf16.mxu0 0
  %151 = vmatmul.mubr.bf16.gmra.mxu0 %v48
  %v152 = vpop.f32.mrf.mxu0
  %v153 = vadd.f32 0.0, %v152
  %v154 = vpop.f32.mrf.mxu0
  %v155 = vpop.f32.mrf.mxu0
  %v156 = vadd.f32 0.0, %v155
  %v157 = vpop.f32.mrf.mxu0
  %158 = vmatprep.mubr.bf16.mxu0 0
  %159 = vmatmul.mubr.bf16.gmra.mxu0 %v49
  %v160 = vpop.f32.mrf.mxu0
  %v161 = vadd.f32 0.0, %v160
  %v162 = vpop.f32.mrf.mxu0
  %v163 = vpop.f32.mrf.mxu0
  %v164 = vadd.f32 0.0, %v163
  %v165 = vpop.f32.mrf.mxu0
  %166 = vmatprep.mubr.bf16.mxu0 0
  %167 = vmatmul.mubr.bf16.gmra.mxu0 %v50
  %v168 = vpop.f32.mrf.mxu0
  %v169 = vadd.f32 0.0, %v168
  %v170 = vpop.f32.mrf.mxu0
  %v171 = vpop.f32.mrf.mxu0
  %v172 = vadd.f32 0.0, %v171
  %v173 = vpop.f32.mrf.mxu0
  %174 = vmatprep.mubr.bf16.mxu0 0
  %175 = vmatmul.mubr.bf16.gmra.mxu0 %v51
  %v176 = vpop.f32.mrf.mxu0
  %v177 = vadd.f32 0.0, %v176
  %v178 = vpop.f32.mrf.mxu0
  %v179 = vpop.f32.mrf.mxu0
  %v180 = vadd.f32 0.0, %v179
  %v181 = vpop.f32.mrf.mxu0
  %182 = vmatprep.mubr.bf16.mxu0 0
  %183 = vmatmul.mubr.bf16.gmra.mxu0 %v52
  %v184 = vpop.f32.mrf.mxu0
  %v185 = vadd.f32 0.0, %v184
  %v186 = vpop.f32.mrf.mxu0
  %v187 = vpop.f32.mrf.mxu0
  %v188 = vadd.f32 0.0, %v187
  %v189 = vpop.f32.mrf.mxu0
  %190 = vmatprep.mubr.bf16.mxu0 0
  %191 = vmatmul.mubr.bf16.gmra.mxu0 %v53
  %v192 = vpop.f32.mrf.mxu0
  %v193 = vadd.f32 0.0, %v192
  %v194 = vpop.f32.mrf.mxu0
  %v195 = vpop.f32.mrf.mxu0
  %v196 = vadd.f32 0.0, %v195
  %v197 = vpop.f32.mrf.mxu0
  %198 = vdwg.mxu0
  %p199 = scmp.eq.s32.totalorder 0, 0
  // Predicated region
  $region22: #{gcn_forward.3} parent=0 // pred_check
    %p200 = pneg %p199
  $region23: #{gcn_forward.3} parent=0 // pred_check_branch
    %202 = sbr.rel (%p200) target = $region25
  $region24: #{gcn_forward.3} parent=0 // pred_region
    %203 = vst [vmem:[#allocation2] sm:$0xff] %v137
    %204 = vst [vmem:[#allocation2 + $0x8] sm:$0xff] %v140
    %205 = vst [vmem:[#allocation2 + $0x10] sm:$0xff] %v145
    %206 = vst [vmem:[#allocation2 + $0x18] sm:$0xff] %v148
    %207 = vst [vmem:[#allocation2 + $0x20] sm:$0xff] %v153
    %208 = vst [vmem:[#allocation2 + $0x28] sm:$0xff] %v156
    %209 = vst [vmem:[#allocation2 + $0x30] sm:$0xff] %v161
    %210 = vst [vmem:[#allocation2 + $0x38] sm:$0xff] %v164
    %211 = vst [vmem:[#allocation2 + $0x40] sm:$0xff] %v169
    %212 = vst [vmem:[#allocation2 + $0x48] sm:$0xff] %v172
    %213 = vst [vmem:[#allocation2 + $0x50] sm:$0xff] %v177
    %214 = vst [vmem:[#allocation2 + $0x58] sm:$0xff] %v180
    %215 = vst [vmem:[#allocation2 + $0x60] sm:$0xff] %v185
    %216 = vst [vmem:[#allocation2 + $0x68] sm:$0xff] %v188
    %217 = vst [vmem:[#allocation2 + $0x70] sm:$0xff] %v193
    %218 = vst [vmem:[#allocation2 + $0x78] sm:$0xff] %v196
  $region25: #{gcn_forward.3} parent=0 // pred_fallthru
    _
  %p219 = scmp.gt.s32.totalorder 0, 0
  // Predicated region
  $region26: #{gcn_forward.3} parent=0 // pred_check
    %p220 = pneg %p219
  $region27: #{gcn_forward.3} parent=0 // pred_check_branch
    %222 = sbr.rel (%p220) target = $region29
  $region28: #{gcn_forward.3} parent=0 // pred_region
    %v223 = vld [vmem:[#allocation2] sm:$0xff]
    %v224 = vld [vmem:[#allocation2 + $0x8] sm:$0xff]
    %v225 = vld [vmem:[#allocation2 + $0x10] sm:$0xff]
    %v226 = vld [vmem:[#allocation2 + $0x18] sm:$0xff]
    %v227 = vld [vmem:[#allocation2 + $0x20] sm:$0xff]
    %v228 = vld [vmem:[#allocation2 + $0x28] sm:$0xff]
    %v229 = vld [vmem:[#allocation2 + $0x30] sm:$0xff]
    %v230 = vld [vmem:[#allocation2 + $0x38] sm:$0xff]
    %v231 = vld [vmem:[#allocation2 + $0x40] sm:$0xff]
    %v232 = vld [vmem:[#allocation2 + $0x48] sm:$0xff]
    %v233 = vld [vmem:[#allocation2 + $0x50] sm:$0xff]
    %v234 = vld [vmem:[#allocation2 + $0x58] sm:$0xff]
    %v235 = vld [vmem:[#allocation2 + $0x60] sm:$0xff]
    %v236 = vld [vmem:[#allocation2 + $0x68] sm:$0xff]
    %v237 = vld [vmem:[#allocation2 + $0x70] sm:$0xff]
    %v238 = vld [vmem:[#allocation2 + $0x78] sm:$0xff]
    %v239 = vadd.f32 %v223, %v137
    %v240 = vadd.f32 %v224, %v140
    %v241 = vadd.f32 %v225, %v145
    %v242 = vadd.f32 %v226, %v148
    %v243 = vadd.f32 %v227, %v153
    %v244 = vadd.f32 %v228, %v156
    %v245 = vadd.f32 %v229, %v161
    %v246 = vadd.f32 %v230, %v164
    %v247 = vadd.f32 %v231, %v169
    %v248 = vadd.f32 %v232, %v172
    %v249 = vadd.f32 %v233, %v177
    %v250 = vadd.f32 %v234, %v180
    %v251 = vadd.f32 %v235, %v185
    %v252 = vadd.f32 %v236, %v188
    %v253 = vadd.f32 %v237, %v193
    %v254 = vadd.f32 %v238, %v196
    %255 = vst [vmem:[#allocation2] sm:$0xff] %v239
    %256 = vst [vmem:[#allocation2 + $0x8] sm:$0xff] %v240
    %257 = vst [vmem:[#allocation2 + $0x10] sm:$0xff] %v241
    %258 = vst [vmem:[#allocation2 + $0x18] sm:$0xff] %v242
    %259 = vst [vmem:[#allocation2 + $0x20] sm:$0xff] %v243
    %260 = vst [vmem:[#allocation2 + $0x28] sm:$0xff] %v244
    %261 = vst [vmem:[#allocation2 + $0x30] sm:$0xff] %v245
    %262 = vst [vmem:[#allocation2 + $0x38] sm:$0xff] %v246
    %263 = vst [vmem:[#allocation2 + $0x40] sm:$0xff] %v247
    %264 = vst [vmem:[#allocation2 + $0x48] sm:$0xff] %v248
    %265 = vst [vmem:[#allocation2 + $0x50] sm:$0xff] %v249
    %266 = vst [vmem:[#allocation2 + $0x58] sm:$0xff] %v250
    %267 = vst [vmem:[#allocation2 + $0x60] sm:$0xff] %v251
    %268 = vst [vmem:[#allocation2 + $0x68] sm:$0xff] %v252
    %269 = vst [vmem:[#allocation2 + $0x70] sm:$0xff] %v253
    %270 = vst [vmem:[#allocation2 + $0x78] sm:$0xff] %v254
  $region29: #{gcn_forward.3} parent=0 // pred_fallthru
    _
  // Predicated region
  $region30: #{gcn_forward.3} parent=0 // pred_check
    %p271 = pneg %p199
  $region31: #{gcn_forward.3} parent=0 // pred_check_branch
    %273 = sbr.rel (%p271) target = $region33
  $region32: #{gcn_forward.3} parent=0 // pred_region
    %v274 = vld [vmem:[%s3] sm:$0xff]
    %v275 = vld [vmem:[%s3 + $0x8] sm:$0xff]
    %v276 = vld [vmem:[%s3 + $0x10] sm:$0xff]
    %v277 = vld [vmem:[%s3 + $0x18] sm:$0xff]
    %v278 = vld [vmem:[%s3 + $0x20] sm:$0xff]
    %v279 = vld [vmem:[%s3 + $0x28] sm:$0xff]
    %v280 = vld [vmem:[%s3 + $0x30] sm:$0xff]
    %v281 = vld [vmem:[%s3 + $0x38] sm:$0xff]
    %v282 = vld [vmem:[%s3 + $0x40] sm:$0xff]
    %v283 = vld [vmem:[%s3 + $0x48] sm:$0xff]
    %v284 = vld [vmem:[%s3 + $0x50] sm:$0xff]
    %v285 = vld [vmem:[%s3 + $0x58] sm:$0xff]
    %v286 = vld [vmem:[%s3 + $0x60] sm:$0xff]
    %v287 = vld [vmem:[%s3 + $0x68] sm:$0xff]
    %v288 = vld [vmem:[%s3 + $0x70] sm:$0xff]
    %v289 = vld [vmem:[%s3 + $0x78] sm:$0xff]
    %v290 = vld [vmem:[#allocation2] sm:$0xff]
    %v291 = vld [vmem:[#allocation2 + $0x8] sm:$0xff]
    %v292 = vld [vmem:[#allocation2 + $0x10] sm:$0xff]
    %v293 = vld [vmem:[#allocation2 + $0x18] sm:$0xff]
    %v294 = vld [vmem:[#allocation2 + $0x20] sm:$0xff]
    %v295 = vld [vmem:[#allocation2 + $0x28] sm:$0xff]
    %v296 = vld [vmem:[#allocation2 + $0x30] sm:$0xff]
    %v297 = vld [vmem:[#allocation2 + $0x38] sm:$0xff]
    %v298 = vld [vmem:[#allocation2 + $0x40] sm:$0xff]
    %v299 = vld [vmem:[#allocation2 + $0x48] sm:$0xff]
    %v300 = vld [vmem:[#allocation2 + $0x50] sm:$0xff]
    %v301 = vld [vmem:[#allocation2 + $0x58] sm:$0xff]
    %v302 = vld [vmem:[#allocation2 + $0x60] sm:$0xff]
    %v303 = vld [vmem:[#allocation2 + $0x68] sm:$0xff]
    %v304 = vld [vmem:[#allocation2 + $0x70] sm:$0xff]
    %v305 = vld [vmem:[#allocation2 + $0x78] sm:$0xff]
    %v306 = vpack.c.bf16 %v291, %v290
    %v307 = vpack.c.bf16 %v293, %v292
    %v308 = vpack.c.bf16 %v295, %v294
    %v309 = vpack.c.bf16 %v297, %v296
    %v310 = vpack.c.bf16 %v299, %v298
    %v311 = vpack.c.bf16 %v301, %v300
    %v312 = vpack.c.bf16 %v303, %v302
    %v313 = vpack.c.bf16 %v305, %v304
    %v314 = vld [vmem:[%s2] sm:$0xf]
    %v315 = vld [vmem:[%s2 + $0x4] sm:$0xf]
    %v316 = vld [vmem:[%s2 + $0x8] sm:$0xf]
    %v317 = vld [vmem:[%s2 + $0xc] sm:$0xf]
    %v318 = vld [vmem:[%s2 + $0x10] sm:$0xf]
    %v319 = vld [vmem:[%s2 + $0x14] sm:$0xf]
    %v320 = vld [vmem:[%s2 + $0x18] sm:$0xf]
    %v321 = vld [vmem:[%s2 + $0x1c] sm:$0xf]
    %v322 = vld [vmem:[%s2 + $0x20] sm:$0xf]
    %v323 = vld [vmem:[%s2 + $0x24] sm:$0xf]
    %v324 = vld [vmem:[%s2 + $0x28] sm:$0xf]
    %v325 = vld [vmem:[%s2 + $0x2c] sm:$0xf]
    %v326 = vld [vmem:[%s2 + $0x30] sm:$0xf]
    %v327 = vld [vmem:[%s2 + $0x34] sm:$0xf]
    %v328 = vld [vmem:[%s2 + $0x38] sm:$0xf]
    %v329 = vld [vmem:[%s2 + $0x3c] sm:$0xf]
    %v346 = vunpack.c.l.b16 %v314
    %v347 = vunpack.c.l.b16 %v315
    %v348 = vunpack.c.l.b16 %v316
    %v349 = vunpack.c.l.b16 %v317
    %v350 = vunpack.c.l.b16 %v318
    %v351 = vunpack.c.l.b16 %v319
    %v352 = vunpack.c.l.b16 %v320
    %v353 = vunpack.c.l.b16 %v321
    %v354 = vunpack.c.l.b16 %v322
    %v355 = vunpack.c.l.b16 %v323
    %v356 = vunpack.c.l.b16 %v324
    %v357 = vunpack.c.l.b16 %v325
    %v358 = vunpack.c.l.b16 %v326
    %v359 = vunpack.c.l.b16 %v327
    %v360 = vunpack.c.l.b16 %v328
    %v361 = vunpack.c.l.b16 %v329
    %v362 = vpack.c.b16 %v347, %v346
    %v363 = vpack.c.b16 %v349, %v348
    %v364 = vpack.c.b16 %v351, %v350
    %v365 = vpack.c.b16 %v353, %v352
    %v366 = vpack.c.b16 %v355, %v354
    %v367 = vpack.c.b16 %v357, %v356
    %v368 = vpack.c.b16 %v359, %v358
    %v369 = vpack.c.b16 %v361, %v360
    %378 = vmatprep.subr.bf16.mxu0 0
    %379 = vmatpush1.bf16.msra.mxu0 %v369
    %380 = vmatprep.subr.bf16.mxu0 0
    %381 = vmatpush1.bf16.msra.mxu0 %v368
    %382 = vmatprep.subr.bf16.mxu0 0
    %383 = vmatpush1.bf16.msra.mxu0 %v367
    %384 = vmatprep.subr.bf16.mxu0 0
    %385 = vmatpush1.bf16.msra.mxu0 %v366
    %386 = vmatprep.subr.bf16.mxu0 0
    %387 = vmatpush1.bf16.msra.mxu0 %v365
    %388 = vmatprep.subr.bf16.mxu0 0
    %389 = vmatpush1.bf16.msra.mxu0 %v364
    %390 = vmatprep.subr.bf16.mxu0 0
    %391 = vmatpush1.bf16.msra.mxu0 %v363
    %392 = vmatprep.subr.bf16.mxu0 0
    %393 = vmatpush1.bf16.msra.mxu0 %v362
    %394 = vmatprep.subr.bf16.mxu0 0
    %395 = vmatpush2.bf16.msra.mxu0 0
    %396 = vmatprep.subr.bf16.mxu0 0
    %397 = vmatpush2.bf16.msra.mxu0 0
    %398 = vmatprep.subr.bf16.mxu0 0
    %399 = vmatpush2.bf16.msra.mxu0 0
    %400 = vmatprep.subr.bf16.mxu0 0
    %401 = vmatpush2.bf16.msra.mxu0 0
    %402 = vmatprep.subr.bf16.mxu0 0
    %403 = vmatpush2.bf16.msra.mxu0 0
    %404 = vmatprep.subr.bf16.mxu0 0
    %405 = vmatpush2.bf16.msra.mxu0 0
    %406 = vmatprep.subr.bf16.mxu0 0
    %407 = vmatpush2.bf16.msra.mxu0 0
    %408 = vmatprep.subr.bf16.mxu0 0
    %409 = vmatpush2.bf16.msra.mxu0 0
    %410 = vmatprep.mubr.bf16.mxu0 0
    %411 = vmatmul.mubr.bf16.gmra.mxu0 %v306
    %v412 = vpop.f32.mrf.mxu0
    %v413 = vadd.f32 0.0, %v412
    %v414 = vpop.f32.mrf.mxu0
    %v415 = vpop.f32.mrf.mxu0
    %v416 = vadd.f32 0.0, %v415
    %v417 = vpop.f32.mrf.mxu0
    %418 = vmatprep.mubr.bf16.mxu0 0
    %419 = vmatmul.mubr.bf16.gmra.mxu0 %v307
    %v420 = vpop.f32.mrf.mxu0
    %v421 = vadd.f32 0.0, %v420
    %v422 = vpop.f32.mrf.mxu0
    %v423 = vpop.f32.mrf.mxu0
    %v424 = vadd.f32 0.0, %v423
    %v425 = vpop.f32.mrf.mxu0
    %426 = vmatprep.mubr.bf16.mxu0 0
    %427 = vmatmul.mubr.bf16.gmra.mxu0 %v308
    %v428 = vpop.f32.mrf.mxu0
    %v429 = vadd.f32 0.0, %v428
    %v430 = vpop.f32.mrf.mxu0
    %v431 = vpop.f32.mrf.mxu0
    %v432 = vadd.f32 0.0, %v431
    %v433 = vpop.f32.mrf.mxu0
    %434 = vmatprep.mubr.bf16.mxu0 0
    %435 = vmatmul.mubr.bf16.gmra.mxu0 %v309
    %v436 = vpop.f32.mrf.mxu0
    %v437 = vadd.f32 0.0, %v436
    %v438 = vpop.f32.mrf.mxu0
    %v439 = vpop.f32.mrf.mxu0
    %v440 = vadd.f32 0.0, %v439
    %v441 = vpop.f32.mrf.mxu0
    %442 = vmatprep.mubr.bf16.mxu0 0
    %443 = vmatmul.mubr.bf16.gmra.mxu0 %v310
    %v444 = vpop.f32.mrf.mxu0
    %v445 = vadd.f32 0.0, %v444
    %v446 = vpop.f32.mrf.mxu0
    %v447 = vpop.f32.mrf.mxu0
    %v448 = vadd.f32 0.0, %v447
    %v449 = vpop.f32.mrf.mxu0
    %450 = vmatprep.mubr.bf16.mxu0 0
    %451 = vmatmul.mubr.bf16.gmra.mxu0 %v311
    %v452 = vpop.f32.mrf.mxu0
    %v453 = vadd.f32 0.0, %v452
    %v454 = vpop.f32.mrf.mxu0
    %v455 = vpop.f32.mrf.mxu0
    %v456 = vadd.f32 0.0, %v455
    %v457 = vpop.f32.mrf.mxu0
    %458 = vmatprep.mubr.bf16.mxu0 0
    %459 = vmatmul.mubr.bf16.gmra.mxu0 %v312
    %v460 = vpop.f32.mrf.mxu0
    %v461 = vadd.f32 0.0, %v460
    %v462 = vpop.f32.mrf.mxu0
    %v463 = vpop.f32.mrf.mxu0
    %v464 = vadd.f32 0.0, %v463
    %v465 = vpop.f32.mrf.mxu0
    %466 = vmatprep.mubr.bf16.mxu0 0
    %467 = vmatmul.mubr.bf16.gmra.mxu0 %v313
    %v468 = vpop.f32.mrf.mxu0
    %v469 = vadd.f32 0.0, %v468
    %v470 = vpop.f32.mrf.mxu0
    %v471 = vpop.f32.mrf.mxu0
    %v472 = vadd.f32 0.0, %v471
    %v473 = vpop.f32.mrf.mxu0
    %474 = vdwg.mxu0
    %476 = vset.pattern.permute.xlu0 0
    %477 = vperm.xlu0 %476, %v274
    %v478 = vpop.permute.xlu0 %477
    %481 = vset.pattern.permute.xlu0 0
    %482 = vperm.xlu0 %481, %v275
    %v483 = vpop.permute.xlu0 %482
    %486 = vset.pattern.permute.xlu0 0
    %487 = vperm.xlu0 %486, %v276
    %v488 = vpop.permute.xlu0 %487
    %491 = vset.pattern.permute.xlu0 0
    %492 = vperm.xlu0 %491, %v277
    %v493 = vpop.permute.xlu0 %492
    %496 = vset.pattern.permute.xlu0 0
    %497 = vperm.xlu0 %496, %v278
    %v498 = vpop.permute.xlu0 %497
    %501 = vset.pattern.permute.xlu0 0
    %502 = vperm.xlu0 %501, %v279
    %v503 = vpop.permute.xlu0 %502
    %506 = vset.pattern.permute.xlu0 0
    %507 = vperm.xlu0 %506, %v280
    %v508 = vpop.permute.xlu0 %507
    %511 = vset.pattern.permute.xlu0 0
    %512 = vperm.xlu0 %511, %v281
    %v513 = vpop.permute.xlu0 %512
    %516 = vset.pattern.permute.xlu0 0
    %517 = vperm.xlu0 %516, %v282
    %v518 = vpop.permute.xlu0 %517
    %521 = vset.pattern.permute.xlu0 0
    %522 = vperm.xlu0 %521, %v283
    %v523 = vpop.permute.xlu0 %522
    %526 = vset.pattern.permute.xlu0 0
    %527 = vperm.xlu0 %526, %v284
    %v528 = vpop.permute.xlu0 %527
    %531 = vset.pattern.permute.xlu0 0
    %532 = vperm.xlu0 %531, %v285
    %v533 = vpop.permute.xlu0 %532
    %536 = vset.pattern.permute.xlu0 0
    %537 = vperm.xlu0 %536, %v286
    %v538 = vpop.permute.xlu0 %537
    %541 = vset.pattern.permute.xlu0 0
    %542 = vperm.xlu0 %541, %v287
    %v543 = vpop.permute.xlu0 %542
    %546 = vset.pattern.permute.xlu0 0
    %547 = vperm.xlu0 %546, %v288
    %v548 = vpop.permute.xlu0 %547
    %551 = vset.pattern.permute.xlu0 0
    %552 = vperm.xlu0 %551, %v289
    %v553 = vpop.permute.xlu0 %552
    %v555 = vmul.f32 %v413, %v478
    %v556 = vmul.f32 %v416, %v483
    %v557 = vmul.f32 %v421, %v488
    %v558 = vmul.f32 %v424, %v493
    %v559 = vmul.f32 %v429, %v498
    %v560 = vmul.f32 %v432, %v503
    %v561 = vmul.f32 %v437, %v508
    %v562 = vmul.f32 %v440, %v513
    %v563 = vmul.f32 %v445, %v518
    %v564 = vmul.f32 %v448, %v523
    %v565 = vmul.f32 %v453, %v528
    %v566 = vmul.f32 %v456, %v533
    %v567 = vmul.f32 %v461, %v538
    %v568 = vmul.f32 %v464, %v543
    %v569 = vmul.f32 %v469, %v548
    %v570 = vmul.f32 %v472, %v553
    %v571 = vld [vmem:[%s4] sm:$0x1]
    %v573 = vlaneseq
    %v574 = vshrl.u32 %v573, 7
    %v575 = vsub.s32 0, %v574
    %v576 = vrot.slane %v571, %v575
    %v578 = vadd.f32 %v555, %v576
    %v579 = vadd.f32 %v556, %v576
    %v580 = vadd.f32 %v557, %v576
    %v581 = vadd.f32 %v558, %v576
    %v582 = vadd.f32 %v559, %v576
    %v583 = vadd.f32 %v560, %v576
    %v584 = vadd.f32 %v561, %v576
    %v585 = vadd.f32 %v562, %v576
    %v586 = vadd.f32 %v563, %v576
    %v587 = vadd.f32 %v564, %v576
    %v588 = vadd.f32 %v565, %v576
    %v589 = vadd.f32 %v566, %v576
    %v590 = vadd.f32 %v567, %v576
    %v591 = vadd.f32 %v568, %v576
    %v592 = vadd.f32 %v569, %v576
    %v593 = vadd.f32 %v570, %v576
    %v594 = vmax.f32 %v578, 0.0
    %v595 = vmax.f32 %v579, 0.0
    %v596 = vmax.f32 %v580, 0.0
    %v597 = vmax.f32 %v581, 0.0
    %v598 = vmax.f32 %v582, 0.0
    %v599 = vmax.f32 %v583, 0.0
    %v600 = vmax.f32 %v584, 0.0
    %v601 = vmax.f32 %v585, 0.0
    %v602 = vmax.f32 %v586, 0.0
    %v603 = vmax.f32 %v587, 0.0
    %v604 = vmax.f32 %v588, 0.0
    %v605 = vmax.f32 %v589, 0.0
    %v606 = vmax.f32 %v590, 0.0
    %v607 = vmax.f32 %v591, 0.0
    %v608 = vmax.f32 %v592, 0.0
    %v609 = vmax.f32 %v593, 0.0
    %v610 = vmul.f32 %v478, %v594
    %v611 = vmul.f32 %v483, %v595
    %v612 = vmul.f32 %v488, %v596
    %v613 = vmul.f32 %v493, %v597
    %v614 = vmul.f32 %v498, %v598
    %v615 = vmul.f32 %v503, %v599
    %v616 = vmul.f32 %v508, %v600
    %v617 = vmul.f32 %v513, %v601
    %v618 = vmul.f32 %v518, %v602
    %v619 = vmul.f32 %v523, %v603
    %v620 = vmul.f32 %v528, %v604
    %v621 = vmul.f32 %v533, %v605
    %v622 = vmul.f32 %v538, %v606
    %v623 = vmul.f32 %v543, %v607
    %v624 = vmul.f32 %v548, %v608
    %v625 = vmul.f32 %v553, %v609
    %v626 = vpack.c.bf16 %v611, %v610
    %v627 = vpack.c.bf16 %v613, %v612
    %v628 = vpack.c.bf16 %v615, %v614
    %v629 = vpack.c.bf16 %v617, %v616
    %v630 = vpack.c.bf16 %v619, %v618
    %v631 = vpack.c.bf16 %v621, %v620
    %v632 = vpack.c.bf16 %v623, %v622
    %v633 = vpack.c.bf16 %v625, %v624
    %v642 = vunpack.c.l.b16 %v626
    %v643 = vunpack.c.h.b16 %v626
    %v644 = vunpack.c.l.b16 %v627
    %v645 = vunpack.c.h.b16 %v627
    %v646 = vunpack.c.l.b16 %v628
    %v647 = vunpack.c.h.b16 %v628
    %v648 = vunpack.c.l.b16 %v629
    %v649 = vunpack.c.h.b16 %v629
    %v650 = vunpack.c.l.b16 %v630
    %v651 = vunpack.c.h.b16 %v630
    %v652 = vunpack.c.l.b16 %v631
    %v653 = vunpack.c.h.b16 %v631
    %v654 = vunpack.c.l.b16 %v632
    %v655 = vunpack.c.h.b16 %v632
    %v656 = vunpack.c.l.b16 %v633
    %v657 = vunpack.c.h.b16 %v633
    %v658 = vpack.c.b16 %v642, %v642
    %v659 = vpack.c.b16 %v643, %v643
    %v660 = vpack.c.b16 %v644, %v644
    %v661 = vpack.c.b16 %v645, %v645
    %v662 = vpack.c.b16 %v646, %v646
    %v663 = vpack.c.b16 %v647, %v647
    %v664 = vpack.c.b16 %v648, %v648
    %v665 = vpack.c.b16 %v649, %v649
    %v666 = vpack.c.b16 %v650, %v650
    %v667 = vpack.c.b16 %v651, %v651
    %v668 = vpack.c.b16 %v652, %v652
    %v669 = vpack.c.b16 %v653, %v653
    %v670 = vpack.c.b16 %v654, %v654
    %v671 = vpack.c.b16 %v655, %v655
    %v672 = vpack.c.b16 %v656, %v656
    %v673 = vpack.c.b16 %v657, %v657
    %690 = vst [vmem:[%s5] sm:$0xf] %v658
    %691 = vst [vmem:[%s5 + $0x4] sm:$0xf] %v659
    %692 = vst [vmem:[%s5 + $0x8] sm:$0xf] %v660
    %693 = vst [vmem:[%s5 + $0xc] sm:$0xf] %v661
    %694 = vst [vmem:[%s5 + $0x10] sm:$0xf] %v662
    %695 = vst [vmem:[%s5 + $0x14] sm:$0xf] %v663
    %696 = vst [vmem:[%s5 + $0x18] sm:$0xf] %v664
    %697 = vst [vmem:[%s5 + $0x1c] sm:$0xf] %v665
    %698 = vst [vmem:[%s5 + $0x20] sm:$0xf] %v666
    %699 = vst [vmem:[%s5 + $0x24] sm:$0xf] %v667
    %700 = vst [vmem:[%s5 + $0x28] sm:$0xf] %v668
    %701 = vst [vmem:[%s5 + $0x2c] sm:$0xf] %v669
    %702 = vst [vmem:[%s5 + $0x30] sm:$0xf] %v670
    %703 = vst [vmem:[%s5 + $0x34] sm:$0xf] %v671
    %704 = vst [vmem:[%s5 + $0x38] sm:$0xf] %v672
    %705 = vst [vmem:[%s5 + $0x3c] sm:$0xf] %v673
  $region33: #{gcn_forward.3} parent=0 // pred_fallthru
    _
  // Predicated region
  $region34: #{gcn_forward.3} parent=0 // pred_check
    _
  $region35: #{gcn_forward.3} parent=0 // pred_check_branch
    %707 = sbr.rel (0) target = $region37
  $region36: #{gcn_forward.3} parent=0 // pred_region
    _
  $region37: #{gcn_forward.3} parent=0 // pred_fallthru
    _
  // Predicated region
  $region38: #{gcn_forward.3} parent=0 // pred_check
    _
  $region39: #{gcn_forward.3} parent=0 // pred_check_branch
    %709 = sbr.rel (0) target = $region41
  $region40: #{gcn_forward.3} parent=0 // pred_region
    _
  $region41: #{gcn_forward.3} parent=0 // pred_fallthru
    _

// kernel: gcn_forward.5
$region0: #{gcn_forward.5}
  #allocation0 [shape = 'u32[]', space=smem, size = 0x4, offset = 0x4, fixed_abs, tag = 'smem constant byte address 0x4 - core index']
  #allocation1 [shape = 'u32[144,128]{1,0:T(1,128)}', space=vmem, size = 0x12000, scoped, tag = 'internal scratch']
  #allocation2 [shape = 'f32[128,128]{1,0:T(8,128)}', space=vmem, size = 0x10000, scoped, tag = 'scratch operand']
  %s0 = inlined_call_operand.vmem [shape: s8[128,128], index: 0, kind: input, shape index: {}]
  %s1 = inlined_call_operand.vmem [shape: bf16[128,128], index: 1, kind: input, shape index: {}]
  %s2 = inlined_call_operand.vmem [shape: bf16[128,128], index: 2, kind: input, shape index: {}]
  %s3 = inlined_call_operand.vmem [shape: f32[128,1], index: 3, kind: input, shape index: {}]
  %s4 = inlined_call_operand.vmem [shape: f32[1,128], index: 4, kind: input, shape index: {}]
  %s5 = inlined_call_operand.vmem [shape: f32[128,128], index: 5, kind: output, shape index: {}]
  %s6 = sld [smem:[#allocation0]]
  $region42: #{gcn_forward.5} parent=0
    _
  %s8 = ssub.s32 1, %s6
  %s9 = scalar_select 0, %s8, %s6
  // Predicated region
  $region2: #{gcn_forward.5} parent=0 // pred_check
    _
  $region3: #{gcn_forward.5} parent=0 // pred_check_branch
    %11 = sbr.rel (0) target = $region5
  $region4: #{gcn_forward.5} parent=0 // pred_region
    _
  $region5: #{gcn_forward.5} parent=0 // pred_fallthru
    _
  // Predicated region
  $region6: #{gcn_forward.5} parent=0 // pred_check
    _
  $region7: #{gcn_forward.5} parent=0 // pred_check_branch
    %13 = sbr.rel (0) target = $region9
  $region8: #{gcn_forward.5} parent=0 // pred_region
    _
  $region9: #{gcn_forward.5} parent=0 // pred_fallthru
    _
  // Predicated region
  $region10: #{gcn_forward.5} parent=0 // pred_check
    _
  $region11: #{gcn_forward.5} parent=0 // pred_check_branch
    %15 = sbr.rel (0) target = $region13
  $region12: #{gcn_forward.5} parent=0 // pred_region
    _
  $region13: #{gcn_forward.5} parent=0 // pred_fallthru
    _
  // Predicated region
  $region14: #{gcn_forward.5} parent=0 // pred_check
    _
  $region15: #{gcn_forward.5} parent=0 // pred_check_branch
    %17 = sbr.rel (0) target = $region17
  $region16: #{gcn_forward.5} parent=0 // pred_region
    _
  $region17: #{gcn_forward.5} parent=0 // pred_fallthru
    _
  // Predicated region
  $region18: #{gcn_forward.5} parent=0 // pred_check
    _
  $region19: #{gcn_forward.5} parent=0 // pred_check_branch
    %19 = sbr.rel (0) target = $region21
  $region20: #{gcn_forward.5} parent=0 // pred_region
    _
  $region21: #{gcn_forward.5} parent=0 // pred_fallthru
    _
  %s21 = smul.u32 0, 128
  %s22 = sshra.s32 %s21, 3
  %s23 = sand.u32 %s21, 7
  %s24 = smul.addr %s22, 4
  %s25 = scalar_lea.vmem %s1, %s24
  %v26 = vld [vmem:[%s25] sm:$0xf]
  %v27 = vld [vmem:[%s25 + $0x4] sm:$0xf]
  %v28 = vld [vmem:[%s25 + $0x8] sm:$0xf]
  %v29 = vld [vmem:[%s25 + $0xc] sm:$0xf]
  %v30 = vld [vmem:[%s25 + $0x10] sm:$0xf]
  %v31 = vld [vmem:[%s25 + $0x14] sm:$0xf]
  %v32 = vld [vmem:[%s25 + $0x18] sm:$0xf]
  %v33 = vld [vmem:[%s25 + $0x1c] sm:$0xf]
  %v34 = vld [vmem:[%s25 + $0x20] sm:$0xf]
  %v35 = vld [vmem:[%s25 + $0x24] sm:$0xf]
  %v36 = vld [vmem:[%s25 + $0x28] sm:$0xf]
  %v37 = vld [vmem:[%s25 + $0x2c] sm:$0xf]
  %v38 = vld [vmem:[%s25 + $0x30] sm:$0xf]
  %v39 = vld [vmem:[%s25 + $0x34] sm:$0xf]
  %v40 = vld [vmem:[%s25 + $0x38] sm:$0xf]
  %v41 = vld [vmem:[%s25 + $0x3c] sm:$0xf]
  %v42 = vld [vmem:[%s0] sm:$0xff]
  %v43 = vld [vmem:[%s0 + $0x8] sm:$0xff]
  %v44 = vld [vmem:[%s0 + $0x10] sm:$0xff]
  %v45 = vld [vmem:[%s0 + $0x18] sm:$0xff]
  %v46 = vunpack.c.l.s8.bf16 %v42
  %v47 = vunpack.c.h.s8.bf16 %v42
  %v48 = vunpack.c.l.s8.bf16 %v43
  %v49 = vunpack.c.h.s8.bf16 %v43
  %v50 = vunpack.c.l.s8.bf16 %v44
  %v51 = vunpack.c.h.s8.bf16 %v44
  %v52 = vunpack.c.l.s8.bf16 %v45
  %v53 = vunpack.c.h.s8.bf16 %v45
  %v70 = vunpack.c.l.b16 %v26
  %v71 = vunpack.c.l.b16 %v27
  %v72 = vunpack.c.l.b16 %v28
  %v73 = vunpack.c.l.b16 %v29
  %v74 = vunpack.c.l.b16 %v30
  %v75 = vunpack.c.l.b16 %v31
  %v76 = vunpack.c.l.b16 %v32
  %v77 = vunpack.c.l.b16 %v33
  %v78 = vunpack.c.l.b16 %v34
  %v79 = vunpack.c.l.b16 %v35
  %v80 = vunpack.c.l.b16 %v36
  %v81 = vunpack.c.l.b16 %v37
  %v82 = vunpack.c.l.b16 %v38
  %v83 = vunpack.c.l.b16 %v39
  %v84 = vunpack.c.l.b16 %v40
  %v85 = vunpack.c.l.b16 %v41
  %v86 = vpack.c.b16 %v71, %v70
  %v87 = vpack.c.b16 %v73, %v72
  %v88 = vpack.c.b16 %v75, %v74
  %v89 = vpack.c.b16 %v77, %v76
  %v90 = vpack.c.b16 %v79, %v78
  %v91 = vpack.c.b16 %v81, %v80
  %v92 = vpack.c.b16 %v83, %v82
  %v93 = vpack.c.b16 %v85, %v84
  %102 = vmatprep.subr.bf16.mxu0 0
  %103 = vmatpush1.bf16.msra.mxu0 %v93
  %104 = vmatprep.subr.bf16.mxu0 0
  %105 = vmatpush1.bf16.msra.mxu0 %v92
  %106 = vmatprep.subr.bf16.mxu0 0
  %107 = vmatpush1.bf16.msra.mxu0 %v91
  %108 = vmatprep.subr.bf16.mxu0 0
  %109 = vmatpush1.bf16.msra.mxu0 %v90
  %110 = vmatprep.subr.bf16.mxu0 0
  %111 = vmatpush1.bf16.msra.mxu0 %v89
  %112 = vmatprep.subr.bf16.mxu0 0
  %113 = vmatpush1.bf16.msra.mxu0 %v88
  %114 = vmatprep.subr.bf16.mxu0 0
  %115 = vmatpush1.bf16.msra.mxu0 %v87
  %116 = vmatprep.subr.bf16.mxu0 0
  %117 = vmatpush1.bf16.msra.mxu0 %v86
  %118 = vmatprep.subr.bf16.mxu0 0
  %119 = vmatpush2.bf16.msra.mxu0 0
  %120 = vmatprep.subr.bf16.mxu0 0
  %121 = vmatpush2.bf16.msra.mxu0 0
  %122 = vmatprep.subr.bf16.mxu0 0
  %123 = vmatpush2.bf16.msra.mxu0 0
  %124 = vmatprep.subr.bf16.mxu0 0
  %125 = vmatpush2.bf16.msra.mxu0 0
  %126 = vmatprep.subr.bf16.mxu0 0
  %127 = vmatpush2.bf16.msra.mxu0 0
  %128 = vmatprep.subr.bf16.mxu0 0
  %129 = vmatpush2.bf16.msra.mxu0 0
  %130 = vmatprep.subr.bf16.mxu0 0
  %131 = vmatpush2.bf16.msra.mxu0 0
  %132 = vmatprep.subr.bf16.mxu0 0
  %133 = vmatpush2.bf16.msra.mxu0 0
  %134 = vmatprep.mubr.bf16.mxu0 0
  %135 = vmatmul.mubr.bf16.gmra.mxu0 %v46
  %v136 = vpop.f32.mrf.mxu0
  %v137 = vadd.f32 0.0, %v136
  %v138 = vpop.f32.mrf.mxu0
  %v139 = vpop.f32.mrf.mxu0
  %v140 = vadd.f32 0.0, %v139
  %v141 = vpop.f32.mrf.mxu0
  %142 = vmatprep.mubr.bf16.mxu0 0
  %143 = vmatmul.mubr.bf16.gmra.mxu0 %v47
  %v144 = vpop.f32.mrf.mxu0
  %v145 = vadd.f32 0.0, %v144
  %v146 = vpop.f32.mrf.mxu0
  %v147 = vpop.f32.mrf.mxu0
  %v148 = vadd.f32 0.0, %v147
  %v149 = vpop.f32.mrf.mxu0
  %150 = vmatprep.mubr.bf16.mxu0 0
  %151 = vmatmul.mubr.bf16.gmra.mxu0 %v48
  %v152 = vpop.f32.mrf.mxu0
  %v153 = vadd.f32 0.0, %v152
  %v154 = vpop.f32.mrf.mxu0
  %v155 = vpop.f32.mrf.mxu0
  %v156 = vadd.f32 0.0, %v155
  %v157 = vpop.f32.mrf.mxu0
  %158 = vmatprep.mubr.bf16.mxu0 0
  %159 = vmatmul.mubr.bf16.gmra.mxu0 %v49
  %v160 = vpop.f32.mrf.mxu0
  %v161 = vadd.f32 0.0, %v160
  %v162 = vpop.f32.mrf.mxu0
  %v163 = vpop.f32.mrf.mxu0
  %v164 = vadd.f32 0.0, %v163
  %v165 = vpop.f32.mrf.mxu0
  %166 = vmatprep.mubr.bf16.mxu0 0
  %167 = vmatmul.mubr.bf16.gmra.mxu0 %v50
  %v168 = vpop.f32.mrf.mxu0
  %v169 = vadd.f32 0.0, %v168
  %v170 = vpop.f32.mrf.mxu0
  %v171 = vpop.f32.mrf.mxu0
  %v172 = vadd.f32 0.0, %v171
  %v173 = vpop.f32.mrf.mxu0
  %174 = vmatprep.mubr.bf16.mxu0 0
  %175 = vmatmul.mubr.bf16.gmra.mxu0 %v51
  %v176 = vpop.f32.mrf.mxu0
  %v177 = vadd.f32 0.0, %v176
  %v178 = vpop.f32.mrf.mxu0
  %v179 = vpop.f32.mrf.mxu0
  %v180 = vadd.f32 0.0, %v179
  %v181 = vpop.f32.mrf.mxu0
  %182 = vmatprep.mubr.bf16.mxu0 0
  %183 = vmatmul.mubr.bf16.gmra.mxu0 %v52
  %v184 = vpop.f32.mrf.mxu0
  %v185 = vadd.f32 0.0, %v184
  %v186 = vpop.f32.mrf.mxu0
  %v187 = vpop.f32.mrf.mxu0
  %v188 = vadd.f32 0.0, %v187
  %v189 = vpop.f32.mrf.mxu0
  %190 = vmatprep.mubr.bf16.mxu0 0
  %191 = vmatmul.mubr.bf16.gmra.mxu0 %v53
  %v192 = vpop.f32.mrf.mxu0
  %v193 = vadd.f32 0.0, %v192
  %v194 = vpop.f32.mrf.mxu0
  %v195 = vpop.f32.mrf.mxu0
  %v196 = vadd.f32 0.0, %v195
  %v197 = vpop.f32.mrf.mxu0
  %198 = vdwg.mxu0
  %p199 = scmp.eq.s32.totalorder 0, 0
  // Predicated region
  $region22: #{gcn_forward.5} parent=0 // pred_check
    %p200 = pneg %p199
  $region23: #{gcn_forward.5} parent=0 // pred_check_branch
    %202 = sbr.rel (%p200) target = $region25
  $region24: #{gcn_forward.5} parent=0 // pred_region
    %203 = vst [vmem:[#allocation2] sm:$0xff] %v137
    %204 = vst [vmem:[#allocation2 + $0x8] sm:$0xff] %v140
    %205 = vst [vmem:[#allocation2 + $0x10] sm:$0xff] %v145
    %206 = vst [vmem:[#allocation2 + $0x18] sm:$0xff] %v148
    %207 = vst [vmem:[#allocation2 + $0x20] sm:$0xff] %v153
    %208 = vst [vmem:[#allocation2 + $0x28] sm:$0xff] %v156
    %209 = vst [vmem:[#allocation2 + $0x30] sm:$0xff] %v161
    %210 = vst [vmem:[#allocation2 + $0x38] sm:$0xff] %v164
    %211 = vst [vmem:[#allocation2 + $0x40] sm:$0xff] %v169
    %212 = vst [vmem:[#allocation2 + $0x48] sm:$0xff] %v172
    %213 = vst [vmem:[#allocation2 + $0x50] sm:$0xff] %v177
    %214 = vst [vmem:[#allocation2 + $0x58] sm:$0xff] %v180
    %215 = vst [vmem:[#allocation2 + $0x60] sm:$0xff] %v185
    %216 = vst [vmem:[#allocation2 + $0x68] sm:$0xff] %v188
    %217 = vst [vmem:[#allocation2 + $0x70] sm:$0xff] %v193
    %218 = vst [vmem:[#allocation2 + $0x78] sm:$0xff] %v196
  $region25: #{gcn_forward.5} parent=0 // pred_fallthru
    _
  %p219 = scmp.gt.s32.totalorder 0, 0
  // Predicated region
  $region26: #{gcn_forward.5} parent=0 // pred_check
    %p220 = pneg %p219
  $region27: #{gcn_forward.5} parent=0 // pred_check_branch
    %222 = sbr.rel (%p220) target = $region29
  $region28: #{gcn_forward.5} parent=0 // pred_region
    %v223 = vld [vmem:[#allocation2] sm:$0xff]
    %v224 = vld [vmem:[#allocation2 + $0x8] sm:$0xff]
    %v225 = vld [vmem:[#allocation2 + $0x10] sm:$0xff]
    %v226 = vld [vmem:[#allocation2 + $0x18] sm:$0xff]
    %v227 = vld [vmem:[#allocation2 + $0x20] sm:$0xff]
    %v228 = vld [vmem:[#allocation2 + $0x28] sm:$0xff]
    %v229 = vld [vmem:[#allocation2 + $0x30] sm:$0xff]
    %v230 = vld [vmem:[#allocation2 + $0x38] sm:$0xff]
    %v231 = vld [vmem:[#allocation2 + $0x40] sm:$0xff]
    %v232 = vld [vmem:[#allocation2 + $0x48] sm:$0xff]
    %v233 = vld [vmem:[#allocation2 + $0x50] sm:$0xff]
    %v234 = vld [vmem:[#allocation2 + $0x58] sm:$0xff]
    %v235 = vld [vmem:[#allocation2 + $0x60] sm:$0xff]
    %v236 = vld [vmem:[#allocation2 + $0x68] sm:$0xff]
    %v237 = vld [vmem:[#allocation2 + $0x70] sm:$0xff]
    %v238 = vld [vmem:[#allocation2 + $0x78] sm:$0xff]
    %v239 = vadd.f32 %v223, %v137
    %v240 = vadd.f32 %v224, %v140
    %v241 = vadd.f32 %v225, %v145
    %v242 = vadd.f32 %v226, %v148
    %v243 = vadd.f32 %v227, %v153
    %v244 = vadd.f32 %v228, %v156
    %v245 = vadd.f32 %v229, %v161
    %v246 = vadd.f32 %v230, %v164
    %v247 = vadd.f32 %v231, %v169
    %v248 = vadd.f32 %v232, %v172
    %v249 = vadd.f32 %v233, %v177
    %v250 = vadd.f32 %v234, %v180
    %v251 = vadd.f32 %v235, %v185
    %v252 = vadd.f32 %v236, %v188
    %v253 = vadd.f32 %v237, %v193
    %v254 = vadd.f32 %v238, %v196
    %255 = vst [vmem:[#allocation2] sm:$0xff] %v239
    %256 = vst [vmem:[#allocation2 + $0x8] sm:$0xff] %v240
    %257 = vst [vmem:[#allocation2 + $0x10] sm:$0xff] %v241
    %258 = vst [vmem:[#allocation2 + $0x18] sm:$0xff] %v242
    %259 = vst [vmem:[#allocation2 + $0x20] sm:$0xff] %v243
    %260 = vst [vmem:[#allocation2 + $0x28] sm:$0xff] %v244
    %261 = vst [vmem:[#allocation2 + $0x30] sm:$0xff] %v245
    %262 = vst [vmem:[#allocation2 + $0x38] sm:$0xff] %v246
    %263 = vst [vmem:[#allocation2 + $0x40] sm:$0xff] %v247
    %264 = vst [vmem:[#allocation2 + $0x48] sm:$0xff] %v248
    %265 = vst [vmem:[#allocation2 + $0x50] sm:$0xff] %v249
    %266 = vst [vmem:[#allocation2 + $0x58] sm:$0xff] %v250
    %267 = vst [vmem:[#allocation2 + $0x60] sm:$0xff] %v251
    %268 = vst [vmem:[#allocation2 + $0x68] sm:$0xff] %v252
    %269 = vst [vmem:[#allocation2 + $0x70] sm:$0xff] %v253
    %270 = vst [vmem:[#allocation2 + $0x78] sm:$0xff] %v254
  $region29: #{gcn_forward.5} parent=0 // pred_fallthru
    _
  // Predicated region
  $region30: #{gcn_forward.5} parent=0 // pred_check
    %p271 = pneg %p199
  $region31: #{gcn_forward.5} parent=0 // pred_check_branch
    %273 = sbr.rel (%p271) target = $region33
  $region32: #{gcn_forward.5} parent=0 // pred_region
    %v274 = vld [vmem:[%s3] sm:$0xff]
    %v275 = vld [vmem:[%s3 + $0x8] sm:$0xff]
    %v276 = vld [vmem:[%s3 + $0x10] sm:$0xff]
    %v277 = vld [vmem:[%s3 + $0x18] sm:$0xff]
    %v278 = vld [vmem:[%s3 + $0x20] sm:$0xff]
    %v279 = vld [vmem:[%s3 + $0x28] sm:$0xff]
    %v280 = vld [vmem:[%s3 + $0x30] sm:$0xff]
    %v281 = vld [vmem:[%s3 + $0x38] sm:$0xff]
    %v282 = vld [vmem:[%s3 + $0x40] sm:$0xff]
    %v283 = vld [vmem:[%s3 + $0x48] sm:$0xff]
    %v284 = vld [vmem:[%s3 + $0x50] sm:$0xff]
    %v285 = vld [vmem:[%s3 + $0x58] sm:$0xff]
    %v286 = vld [vmem:[%s3 + $0x60] sm:$0xff]
    %v287 = vld [vmem:[%s3 + $0x68] sm:$0xff]
    %v288 = vld [vmem:[%s3 + $0x70] sm:$0xff]
    %v289 = vld [vmem:[%s3 + $0x78] sm:$0xff]
    %v290 = vld [vmem:[#allocation2] sm:$0xff]
    %v291 = vld [vmem:[#allocation2 + $0x8] sm:$0xff]
    %v292 = vld [vmem:[#allocation2 + $0x10] sm:$0xff]
    %v293 = vld [vmem:[#allocation2 + $0x18] sm:$0xff]
    %v294 = vld [vmem:[#allocation2 + $0x20] sm:$0xff]
    %v295 = vld [vmem:[#allocation2 + $0x28] sm:$0xff]
    %v296 = vld [vmem:[#allocation2 + $0x30] sm:$0xff]
    %v297 = vld [vmem:[#allocation2 + $0x38] sm:$0xff]
    %v298 = vld [vmem:[#allocation2 + $0x40] sm:$0xff]
    %v299 = vld [vmem:[#allocation2 + $0x48] sm:$0xff]
    %v300 = vld [vmem:[#allocation2 + $0x50] sm:$0xff]
    %v301 = vld [vmem:[#allocation2 + $0x58] sm:$0xff]
    %v302 = vld [vmem:[#allocation2 + $0x60] sm:$0xff]
    %v303 = vld [vmem:[#allocation2 + $0x68] sm:$0xff]
    %v304 = vld [vmem:[#allocation2 + $0x70] sm:$0xff]
    %v305 = vld [vmem:[#allocation2 + $0x78] sm:$0xff]
    %v306 = vpack.c.bf16 %v291, %v290
    %v307 = vpack.c.bf16 %v293, %v292
    %v308 = vpack.c.bf16 %v295, %v294
    %v309 = vpack.c.bf16 %v297, %v296
    %v310 = vpack.c.bf16 %v299, %v298
    %v311 = vpack.c.bf16 %v301, %v300
    %v312 = vpack.c.bf16 %v303, %v302
    %v313 = vpack.c.bf16 %v305, %v304
    %v314 = vld [vmem:[%s2] sm:$0xf]
    %v315 = vld [vmem:[%s2 + $0x4] sm:$0xf]
    %v316 = vld [vmem:[%s2 + $0x8] sm:$0xf]
    %v317 = vld [vmem:[%s2 + $0xc] sm:$0xf]
    %v318 = vld [vmem:[%s2 + $0x10] sm:$0xf]
    %v319 = vld [vmem:[%s2 + $0x14] sm:$0xf]
    %v320 = vld [vmem:[%s2 + $0x18] sm:$0xf]
    %v321 = vld [vmem:[%s2 + $0x1c] sm:$0xf]
    %v322 = vld [vmem:[%s2 + $0x20] sm:$0xf]
    %v323 = vld [vmem:[%s2 + $0x24] sm:$0xf]
    %v324 = vld [vmem:[%s2 + $0x28] sm:$0xf]
    %v325 = vld [vmem:[%s2 + $0x2c] sm:$0xf]
    %v326 = vld [vmem:[%s2 + $0x30] sm:$0xf]
    %v327 = vld [vmem:[%s2 + $0x34] sm:$0xf]
    %v328 = vld [vmem:[%s2 + $0x38] sm:$0xf]
    %v329 = vld [vmem:[%s2 + $0x3c] sm:$0xf]
    %v346 = vunpack.c.l.b16 %v314
    %v347 = vunpack.c.l.b16 %v315
    %v348 = vunpack.c.l.b16 %v316
    %v349 = vunpack.c.l.b16 %v317
    %v350 = vunpack.c.l.b16 %v318
    %v351 = vunpack.c.l.b16 %v319
    %v352 = vunpack.c.l.b16 %v320
    %v353 = vunpack.c.l.b16 %v321
    %v354 = vunpack.c.l.b16 %v322
    %v355 = vunpack.c.l.b16 %v323
    %v356 = vunpack.c.l.b16 %v324
    %v357 = vunpack.c.l.b16 %v325
    %v358 = vunpack.c.l.b16 %v326
    %v359 = vunpack.c.l.b16 %v327
    %v360 = vunpack.c.l.b16 %v328
    %v361 = vunpack.c.l.b16 %v329
    %v362 = vpack.c.b16 %v347, %v346
    %v363 = vpack.c.b16 %v349, %v348
    %v364 = vpack.c.b16 %v351, %v350
    %v365 = vpack.c.b16 %v353, %v352
    %v366 = vpack.c.b16 %v355, %v354
    %v367 = vpack.c.b16 %v357, %v356
    %v368 = vpack.c.b16 %v359, %v358
    %v369 = vpack.c.b16 %v361, %v360
    %378 = vmatprep.subr.bf16.mxu0 0
    %379 = vmatpush1.bf16.msra.mxu0 %v369
    %380 = vmatprep.subr.bf16.mxu0 0
    %381 = vmatpush1.bf16.msra.mxu0 %v368
    %382 = vmatprep.subr.bf16.mxu0 0
    %383 = vmatpush1.bf16.msra.mxu0 %v367
    %384 = vmatprep.subr.bf16.mxu0 0
    %385 = vmatpush1.bf16.msra.mxu0 %v366
    %386 = vmatprep.subr.bf16.mxu0 0
    %387 = vmatpush1.bf16.msra.mxu0 %v365
    %388 = vmatprep.subr.bf16.mxu0 0
    %389 = vmatpush1.bf16.msra.mxu0 %v364
    %390 = vmatprep.subr.bf16.mxu0 0
    %391 = vmatpush1.bf16.msra.mxu0 %v363
    %392 = vmatprep.subr.bf16.mxu0 0
    %393 = vmatpush1.bf16.msra.mxu0 %v362
    %394 = vmatprep.subr.bf16.mxu0 0
    %395 = vmatpush2.bf16.msra.mxu0 0
    %396 = vmatprep.subr.bf16.mxu0 0
    %397 = vmatpush2.bf16.msra.mxu0 0
    %398 = vmatprep.subr.bf16.mxu0 0
    %399 = vmatpush2.bf16.msra.mxu0 0
    %400 = vmatprep.subr.bf16.mxu0 0
    %401 = vmatpush2.bf16.msra.mxu0 0
    %402 = vmatprep.subr.bf16.mxu0 0
    %403 = vmatpush2.bf16.msra.mxu0 0
    %404 = vmatprep.subr.bf16.mxu0 0
    %405 = vmatpush2.bf16.msra.mxu0 0
    %406 = vmatprep.subr.bf16.mxu0 0
    %407 = vmatpush2.bf16.msra.mxu0 0
    %408 = vmatprep.subr.bf16.mxu0 0
    %409 = vmatpush2.bf16.msra.mxu0 0
    %410 = vmatprep.mubr.bf16.mxu0 0
    %411 = vmatmul.mubr.bf16.gmra.mxu0 %v306
    %v412 = vpop.f32.mrf.mxu0
    %v413 = vadd.f32 0.0, %v412
    %v414 = vpop.f32.mrf.mxu0
    %v415 = vpop.f32.mrf.mxu0
    %v416 = vadd.f32 0.0, %v415
    %v417 = vpop.f32.mrf.mxu0
    %418 = vmatprep.mubr.bf16.mxu0 0
    %419 = vmatmul.mubr.bf16.gmra.mxu0 %v307
    %v420 = vpop.f32.mrf.mxu0
    %v421 = vadd.f32 0.0, %v420
    %v422 = vpop.f32.mrf.mxu0
    %v423 = vpop.f32.mrf.mxu0
    %v424 = vadd.f32 0.0, %v423
    %v425 = vpop.f32.mrf.mxu0
    %426 = vmatprep.mubr.bf16.mxu0 0
    %427 = vmatmul.mubr.bf16.gmra.mxu0 %v308
    %v428 = vpop.f32.mrf.mxu0
    %v429 = vadd.f32 0.0, %v428
    %v430 = vpop.f32.mrf.mxu0
    %v431 = vpop.f32.mrf.mxu0
    %v432 = vadd.f32 0.0, %v431
    %v433 = vpop.f32.mrf.mxu0
    %434 = vmatprep.mubr.bf16.mxu0 0
    %435 = vmatmul.mubr.bf16.gmra.mxu0 %v309
    %v436 = vpop.f32.mrf.mxu0
    %v437 = vadd.f32 0.0, %v436
    %v438 = vpop.f32.mrf.mxu0
    %v439 = vpop.f32.mrf.mxu0
    %v440 = vadd.f32 0.0, %v439
    %v441 = vpop.f32.mrf.mxu0
    %442 = vmatprep.mubr.bf16.mxu0 0
    %443 = vmatmul.mubr.bf16.gmra.mxu0 %v310
    %v444 = vpop.f32.mrf.mxu0
    %v445 = vadd.f32 0.0, %v444
    %v446 = vpop.f32.mrf.mxu0
    %v447 = vpop.f32.mrf.mxu0
    %v448 = vadd.f32 0.0, %v447
    %v449 = vpop.f32.mrf.mxu0
    %450 = vmatprep.mubr.bf16.mxu0 0
    %451 = vmatmul.mubr.bf16.gmra.mxu0 %v311
    %v452 = vpop.f32.mrf.mxu0
    %v453 = vadd.f32 0.0, %v452
    %v454 = vpop.f32.mrf.mxu0
    %v455 = vpop.f32.mrf.mxu0
    %v456 = vadd.f32 0.0, %v455
    %v457 = vpop.f32.mrf.mxu0
    %458 = vmatprep.mubr.bf16.mxu0 0
    %459 = vmatmul.mubr.bf16.gmra.mxu0 %v312
    %v460 = vpop.f32.mrf.mxu0
    %v461 = vadd.f32 0.0, %v460
    %v462 = vpop.f32.mrf.mxu0
    %v463 = vpop.f32.mrf.mxu0
    %v464 = vadd.f32 0.0, %v463
    %v465 = vpop.f32.mrf.mxu0
    %466 = vmatprep.mubr.bf16.mxu0 0
    %467 = vmatmul.mubr.bf16.gmra.mxu0 %v313
    %v468 = vpop.f32.mrf.mxu0
    %v469 = vadd.f32 0.0, %v468
    %v470 = vpop.f32.mrf.mxu0
    %v471 = vpop.f32.mrf.mxu0
    %v472 = vadd.f32 0.0, %v471
    %v473 = vpop.f32.mrf.mxu0
    %474 = vdwg.mxu0
    %476 = vset.pattern.permute.xlu0 0
    %477 = vperm.xlu0 %476, %v274
    %v478 = vpop.permute.xlu0 %477
    %481 = vset.pattern.permute.xlu0 0
    %482 = vperm.xlu0 %481, %v275
    %v483 = vpop.permute.xlu0 %482
    %486 = vset.pattern.permute.xlu0 0
    %487 = vperm.xlu0 %486, %v276
    %v488 = vpop.permute.xlu0 %487
    %491 = vset.pattern.permute.xlu0 0
    %492 = vperm.xlu0 %491, %v277
    %v493 = vpop.permute.xlu0 %492
    %496 = vset.pattern.permute.xlu0 0
    %497 = vperm.xlu0 %496, %v278
    %v498 = vpop.permute.xlu0 %497
    %501 = vset.pattern.permute.xlu0 0
    %502 = vperm.xlu0 %501, %v279
    %v503 = vpop.permute.xlu0 %502
    %506 = vset.pattern.permute.xlu0 0
    %507 = vperm.xlu0 %506, %v280
    %v508 = vpop.permute.xlu0 %507
    %511 = vset.pattern.permute.xlu0 0
    %512 = vperm.xlu0 %511, %v281
    %v513 = vpop.permute.xlu0 %512
    %516 = vset.pattern.permute.xlu0 0
    %517 = vperm.xlu0 %516, %v282
    %v518 = vpop.permute.xlu0 %517
    %521 = vset.pattern.permute.xlu0 0
    %522 = vperm.xlu0 %521, %v283
    %v523 = vpop.permute.xlu0 %522
    %526 = vset.pattern.permute.xlu0 0
    %527 = vperm.xlu0 %526, %v284
    %v528 = vpop.permute.xlu0 %527
    %531 = vset.pattern.permute.xlu0 0
    %532 = vperm.xlu0 %531, %v285
    %v533 = vpop.permute.xlu0 %532
    %536 = vset.pattern.permute.xlu0 0
    %537 = vperm.xlu0 %536, %v286
    %v538 = vpop.permute.xlu0 %537
    %541 = vset.pattern.permute.xlu0 0
    %542 = vperm.xlu0 %541, %v287
    %v543 = vpop.permute.xlu0 %542
    %546 = vset.pattern.permute.xlu0 0
    %547 = vperm.xlu0 %546, %v288
    %v548 = vpop.permute.xlu0 %547
    %551 = vset.pattern.permute.xlu0 0
    %552 = vperm.xlu0 %551, %v289
    %v553 = vpop.permute.xlu0 %552
    %v555 = vmul.f32 %v413, %v478
    %v556 = vmul.f32 %v416, %v483
    %v557 = vmul.f32 %v421, %v488
    %v558 = vmul.f32 %v424, %v493
    %v559 = vmul.f32 %v429, %v498
    %v560 = vmul.f32 %v432, %v503
    %v561 = vmul.f32 %v437, %v508
    %v562 = vmul.f32 %v440, %v513
    %v563 = vmul.f32 %v445, %v518
    %v564 = vmul.f32 %v448, %v523
    %v565 = vmul.f32 %v453, %v528
    %v566 = vmul.f32 %v456, %v533
    %v567 = vmul.f32 %v461, %v538
    %v568 = vmul.f32 %v464, %v543
    %v569 = vmul.f32 %v469, %v548
    %v570 = vmul.f32 %v472, %v553
    %v571 = vld [vmem:[%s4] sm:$0x1]
    %v573 = vlaneseq
    %v574 = vshrl.u32 %v573, 7
    %v575 = vsub.s32 0, %v574
    %v576 = vrot.slane %v571, %v575
    %v578 = vadd.f32 %v555, %v576
    %v579 = vadd.f32 %v556, %v576
    %v580 = vadd.f32 %v557, %v576
    %v581 = vadd.f32 %v558, %v576
    %v582 = vadd.f32 %v559, %v576
    %v583 = vadd.f32 %v560, %v576
    %v584 = vadd.f32 %v561, %v576
    %v585 = vadd.f32 %v562, %v576
    %v586 = vadd.f32 %v563, %v576
    %v587 = vadd.f32 %v564, %v576
    %v588 = vadd.f32 %v565, %v576
    %v589 = vadd.f32 %v566, %v576
    %v590 = vadd.f32 %v567, %v576
    %v591 = vadd.f32 %v568, %v576
    %v592 = vadd.f32 %v569, %v576
    %v593 = vadd.f32 %v570, %v576
    %v594 = vlaneseq
    %v595 = vand.u32 %v594, 127
    %vm596 = vcmp.lt.s32.totalorder %v595, 8
    %v597 = vsel %vm596, %v578, -1e+30
    %v598 = vsel %vm596, %v579, -1e+30
    %v599 = vsel %vm596, %v580, -1e+30
    %v600 = vsel %vm596, %v581, -1e+30
    %v601 = vsel %vm596, %v582, -1e+30
    %v602 = vsel %vm596, %v583, -1e+30
    %v603 = vsel %vm596, %v584, -1e+30
    %v604 = vsel %vm596, %v585, -1e+30
    %v605 = vsel %vm596, %v586, -1e+30
    %v606 = vsel %vm596, %v587, -1e+30
    %v607 = vsel %vm596, %v588, -1e+30
    %v608 = vsel %vm596, %v589, -1e+30
    %v609 = vsel %vm596, %v590, -1e+30
    %v610 = vsel %vm596, %v591, -1e+30
    %v611 = vsel %vm596, %v592, -1e+30
    %v612 = vsel %vm596, %v593, -1e+30
    %613 = vmax.xlane.f32.xlu0 %v597
    %v614 = vpop.xlane.xlu0 %613
    %615 = vmax.xlane.f32.xlu0 %v598
    %v616 = vpop.xlane.xlu0 %615
    %617 = vmax.xlane.f32.xlu0 %v599
    %v618 = vpop.xlane.xlu0 %617
    %619 = vmax.xlane.f32.xlu0 %v600
    %v620 = vpop.xlane.xlu0 %619
    %621 = vmax.xlane.f32.xlu0 %v601
    %v622 = vpop.xlane.xlu0 %621
    %623 = vmax.xlane.f32.xlu0 %v602
    %v624 = vpop.xlane.xlu0 %623
    %625 = vmax.xlane.f32.xlu0 %v603
    %v626 = vpop.xlane.xlu0 %625
    %627 = vmax.xlane.f32.xlu0 %v604
    %v628 = vpop.xlane.xlu0 %627
    %629 = vmax.xlane.f32.xlu0 %v605
    %v630 = vpop.xlane.xlu0 %629
    %631 = vmax.xlane.f32.xlu0 %v606
    %v632 = vpop.xlane.xlu0 %631
    %633 = vmax.xlane.f32.xlu0 %v607
    %v634 = vpop.xlane.xlu0 %633
    %635 = vmax.xlane.f32.xlu0 %v608
    %v636 = vpop.xlane.xlu0 %635
    %637 = vmax.xlane.f32.xlu0 %v609
    %v638 = vpop.xlane.xlu0 %637
    %639 = vmax.xlane.f32.xlu0 %v610
    %v640 = vpop.xlane.xlu0 %639
    %641 = vmax.xlane.f32.xlu0 %v611
    %v642 = vpop.xlane.xlu0 %641
    %643 = vmax.xlane.f32.xlu0 %v612
    %v644 = vpop.xlane.xlu0 %643
    %v645 = vsub.f32 %v578, %v614
    %v646 = vsub.f32 %v579, %v616
    %v647 = vsub.f32 %v580, %v618
    %v648 = vsub.f32 %v581, %v620
    %v649 = vsub.f32 %v582, %v622
    %v650 = vsub.f32 %v583, %v624
    %v651 = vsub.f32 %v584, %v626
    %v652 = vsub.f32 %v585, %v628
    %v653 = vsub.f32 %v586, %v630
    %v654 = vsub.f32 %v587, %v632
    %v655 = vsub.f32 %v588, %v634
    %v656 = vsub.f32 %v589, %v636
    %v657 = vsub.f32 %v590, %v638
    %v658 = vsub.f32 %v591, %v640
    %v659 = vsub.f32 %v592, %v642
    %v660 = vsub.f32 %v593, %v644
    %v661 = vmul.f32 %v645, 1.442695
    %v662 = vpow.pop %v661
    %v663 = vmul.f32 %v646, 1.442695
    %v664 = vpow.pop %v663
    %v665 = vmul.f32 %v647, 1.442695
    %v666 = vpow.pop %v665
    %v667 = vmul.f32 %v648, 1.442695
    %v668 = vpow.pop %v667
    %v669 = vmul.f32 %v649, 1.442695
    %v670 = vpow.pop %v669
    %v671 = vmul.f32 %v650, 1.442695
    %v672 = vpow.pop %v671
    %v673 = vmul.f32 %v651, 1.442695
    %v674 = vpow.pop %v673
    %v675 = vmul.f32 %v652, 1.442695
    %v676 = vpow.pop %v675
    %v677 = vmul.f32 %v653, 1.442695
    %v678 = vpow.pop %v677
    %v679 = vmul.f32 %v654, 1.442695
    %v680 = vpow.pop %v679
    %v681 = vmul.f32 %v655, 1.442695
    %v682 = vpow.pop %v681
    %v683 = vmul.f32 %v656, 1.442695
    %v684 = vpow.pop %v683
    %v685 = vmul.f32 %v657, 1.442695
    %v686 = vpow.pop %v685
    %v687 = vmul.f32 %v658, 1.442695
    %v688 = vpow.pop %v687
    %v689 = vmul.f32 %v659, 1.442695
    %v690 = vpow.pop %v689
    %v691 = vmul.f32 %v660, 1.442695
    %v692 = vpow.pop %v691
    %v693 = vsel %vm596, %v662, 0.0
    %v694 = vsel %vm596, %v664, 0.0
    %v695 = vsel %vm596, %v666, 0.0
    %v696 = vsel %vm596, %v668, 0.0
    %v697 = vsel %vm596, %v670, 0.0
    %v698 = vsel %vm596, %v672, 0.0
    %v699 = vsel %vm596, %v674, 0.0
    %v700 = vsel %vm596, %v676, 0.0
    %v701 = vsel %vm596, %v678, 0.0
    %v702 = vsel %vm596, %v680, 0.0
    %v703 = vsel %vm596, %v682, 0.0
    %v704 = vsel %vm596, %v684, 0.0
    %v705 = vsel %vm596, %v686, 0.0
    %v706 = vsel %vm596, %v688, 0.0
    %v707 = vsel %vm596, %v690, 0.0
    %v708 = vsel %vm596, %v692, 0.0
    %709 = vadd.xlane.f32.xlu0 %v693
    %v710 = vpop.xlane.xlu0 %709
    %711 = vadd.xlane.f32.xlu0 %v694
    %v712 = vpop.xlane.xlu0 %711
    %713 = vadd.xlane.f32.xlu0 %v695
    %v714 = vpop.xlane.xlu0 %713
    %715 = vadd.xlane.f32.xlu0 %v696
    %v716 = vpop.xlane.xlu0 %715
    %717 = vadd.xlane.f32.xlu0 %v697
    %v718 = vpop.xlane.xlu0 %717
    %719 = vadd.xlane.f32.xlu0 %v698
    %v720 = vpop.xlane.xlu0 %719
    %721 = vadd.xlane.f32.xlu0 %v699
    %v722 = vpop.xlane.xlu0 %721
    %723 = vadd.xlane.f32.xlu0 %v700
    %v724 = vpop.xlane.xlu0 %723
    %725 = vadd.xlane.f32.xlu0 %v701
    %v726 = vpop.xlane.xlu0 %725
    %727 = vadd.xlane.f32.xlu0 %v702
    %v728 = vpop.xlane.xlu0 %727
    %729 = vadd.xlane.f32.xlu0 %v703
    %v730 = vpop.xlane.xlu0 %729
    %731 = vadd.xlane.f32.xlu0 %v704
    %v732 = vpop.xlane.xlu0 %731
    %733 = vadd.xlane.f32.xlu0 %v705
    %v734 = vpop.xlane.xlu0 %733
    %735 = vadd.xlane.f32.xlu0 %v706
    %v736 = vpop.xlane.xlu0 %735
    %737 = vadd.xlane.f32.xlu0 %v707
    %v738 = vpop.xlane.xlu0 %737
    %739 = vadd.xlane.f32.xlu0 %v708
    %v740 = vpop.xlane.xlu0 %739
    %v741 = vlog2.pop %v710
    %v742 = vmul.f32 %v741, 0.6931472
    %v743 = vlog2.pop %v712
    %v744 = vmul.f32 %v743, 0.6931472
    %v745 = vlog2.pop %v714
    %v746 = vmul.f32 %v745, 0.6931472
    %v747 = vlog2.pop %v716
    %v748 = vmul.f32 %v747, 0.6931472
    %v749 = vlog2.pop %v718
    %v750 = vmul.f32 %v749, 0.6931472
    %v751 = vlog2.pop %v720
    %v752 = vmul.f32 %v751, 0.6931472
    %v753 = vlog2.pop %v722
    %v754 = vmul.f32 %v753, 0.6931472
    %v755 = vlog2.pop %v724
    %v756 = vmul.f32 %v755, 0.6931472
    %v757 = vlog2.pop %v726
    %v758 = vmul.f32 %v757, 0.6931472
    %v759 = vlog2.pop %v728
    %v760 = vmul.f32 %v759, 0.6931472
    %v761 = vlog2.pop %v730
    %v762 = vmul.f32 %v761, 0.6931472
    %v763 = vlog2.pop %v732
    %v764 = vmul.f32 %v763, 0.6931472
    %v765 = vlog2.pop %v734
    %v766 = vmul.f32 %v765, 0.6931472
    %v767 = vlog2.pop %v736
    %v768 = vmul.f32 %v767, 0.6931472
    %v769 = vlog2.pop %v738
    %v770 = vmul.f32 %v769, 0.6931472
    %v771 = vlog2.pop %v740
    %v772 = vmul.f32 %v771, 0.6931472
    %v773 = vsub.f32 %v645, %v742
    %v774 = vsub.f32 %v646, %v744
    %v775 = vsub.f32 %v647, %v746
    %v776 = vsub.f32 %v648, %v748
    %v777 = vsub.f32 %v649, %v750
    %v778 = vsub.f32 %v650, %v752
    %v779 = vsub.f32 %v651, %v754
    %v780 = vsub.f32 %v652, %v756
    %v781 = vsub.f32 %v653, %v758
    %v782 = vsub.f32 %v654, %v760
    %v783 = vsub.f32 %v655, %v762
    %v784 = vsub.f32 %v656, %v764
    %v785 = vsub.f32 %v657, %v766
    %v786 = vsub.f32 %v658, %v768
    %v787 = vsub.f32 %v659, %v770
    %v788 = vsub.f32 %v660, %v772
    %v789 = vsel %vm596, %v773, 0.0
    %v790 = vsel %vm596, %v774, 0.0
    %v791 = vsel %vm596, %v775, 0.0
    %v792 = vsel %vm596, %v776, 0.0
    %v793 = vsel %vm596, %v777, 0.0
    %v794 = vsel %vm596, %v778, 0.0
    %v795 = vsel %vm596, %v779, 0.0
    %v796 = vsel %vm596, %v780, 0.0
    %v797 = vsel %vm596, %v781, 0.0
    %v798 = vsel %vm596, %v782, 0.0
    %v799 = vsel %vm596, %v783, 0.0
    %v800 = vsel %vm596, %v784, 0.0
    %v801 = vsel %vm596, %v785, 0.0
    %v802 = vsel %vm596, %v786, 0.0
    %v803 = vsel %vm596, %v787, 0.0
    %v804 = vsel %vm596, %v788, 0.0
    %805 = vst [vmem:[%s5] sm:$0xff] %v789
    %806 = vst [vmem:[%s5 + $0x8] sm:$0xff] %v790
    %807 = vst [vmem:[%s5 + $0x10] sm:$0xff] %v791
    %808 = vst [vmem:[%s5 + $0x18] sm:$0xff] %v792
    %809 = vst [vmem:[%s5 + $0x20] sm:$0xff] %v793
    %810 = vst [vmem:[%s5 + $0x28] sm:$0xff] %v794
    %811 = vst [vmem:[%s5 + $0x30] sm:$0xff] %v795
    %812 = vst [vmem:[%s5 + $0x38] sm:$0xff] %v796
    %813 = vst [vmem:[%s5 + $0x40] sm:$0xff] %v797
    %814 = vst [vmem:[%s5 + $0x48] sm:$0xff] %v798
    %815 = vst [vmem:[%s5 + $0x50] sm:$0xff] %v799
    %816 = vst [vmem:[%s5 + $0x58] sm:$0xff] %v800
    %817 = vst [vmem:[%s5 + $0x60] sm:$0xff] %v801
    %818 = vst [vmem:[%s5 + $0x68] sm:$0xff] %v802
    %819 = vst [vmem:[%s5 + $0x70] sm:$0xff] %v803
    %820 = vst [vmem:[%s5 + $0x78] sm:$0xff] %v804
  $region33: #{gcn_forward.5} parent=0 // pred_fallthru
    _
  // Predicated region
  $region34: #{gcn_forward.5} parent=0 // pred_check
    _
  $region35: #{gcn_forward.5} parent=0 // pred_check_branch
    %822 = sbr.rel (0) target = $region37
  $region36: #{gcn_forward.5} parent=0 // pred_region
    _
  $region37: #{gcn_forward.5} parent=0 // pred_fallthru
    _
  // Predicated region
  $region38: #{gcn_forward.5} parent=0 // pred_check
    _
  $region39: #{gcn_forward.5} parent=0 // pred_check_branch
    %824 = sbr.rel (0) target = $region41
  $region40: #{gcn_forward.5} parent=0 // pred_region
    _
  $region41: #{gcn_forward.5} parent=0 // pred_fallthru
    _

</llo_original>
